<compile_context>
chip_gen: v7x
topology: tpu7x:2x2x1
jax: 0.10.0
libtpu: 0.0.40
codegen_flags: <defaults>
</compile_context>

<pallas_src>
import functools

import jax
import jax.numpy as jnp
from jax.experimental import pallas as pl
from jax.experimental.pallas import tpu as pltpu


def _round_up(n, m):
    return ((n + m - 1) // m) * m


def _pad_to(a, shape):
    out = jnp.zeros(shape, a.dtype)
    return out.at[tuple(slice(0, s) for s in a.shape)].set(a)


def _pick_time_chunk(T, K, B_pad, H_pad, target_bytes=1 << 20):
    """Largest multiple of K that divides T with xpd/xph scratch <= target."""
    per_step = 2 * B_pad * H_pad * 4
    tc = max(K, min(T, max(K, target_bytes // per_step) // K * K))
    while T % tc != 0:
        tc -= K
    return tc


# ---------------------------------------------------------------------------
# Fused kernel: one grid step = one time-chunk of TC steps.
#   x_ref   : (TC*B, I)  streamed input chunk
#   weights : resident in VMEM (block index constant across the grid)
#   out_ref : (TC*B, O)  per-chunk output (o_t = h_t W_o + b_o, fused)
#   hfin_ref: (K, B, H)  final hidden history, newest-first (written once)
#   hist_ref: (K, B, H)  persistent circular hidden history (scratch)
#   xpd/xph : (TC*B, H)  per-chunk hoisted input projections (scratch)
# ---------------------------------------------------------------------------
def mrnn_fused_kernel(x_ref, wd_ref, wh_ref, bd_ref, bh_ref,
                      ud_ref, uh_ref, wo_ref, bo_ref,
                      out_ref, hfin_ref,
                      hist_ref, xpd_ref, xph_ref,
                      *, K, TC):
    c = pl.program_id(0)
    B = hist_ref.shape[1]
    O = out_ref.shape[1]

    # h = None at call time -> zero-init the persistent history once; it then
    # carries across time-chunk grid steps in VMEM scratch.
    @pl.when(c == 0)
    def _():
        hist_ref[...] = jnp.zeros_like(hist_ref)

    # ---- Chunk prologue (off the serial critical path): hoisted input
    # projections as two big lane-dense matmuls, biases folded in.  Fused here
    # so xpd/xph never touch HBM and there is no wrapper-level lane split.
    x2d = x_ref[...]                                               # (TC*B, I)
    xpd_ref[...] = (jnp.dot(x2d, wd_ref[...],
                            preferred_element_type=jnp.float32) + bd_ref[...])
    xph_ref[...] = (jnp.dot(x2d, wh_ref[...],
                            preferred_element_type=jnp.float32) + bh_ref[...])

    # Hoist the output-projection bias broadcast out of the serial loop
    # (JAX does not CSE broadcast_in_dim inside loops).
    bo = jnp.broadcast_to(bo_ref[...], (B, O))

    # ---- Serial recurrence, unrolled in groups of K so every circular-buffer
    # slot index is a static constant (no per-step modulo / dynamic address
    # math on the scalar path).  Chunk boundaries are multiples of K, so the
    # slot of global step t is simply t % K == j.
    @pl.loop(0, TC // K)
    def _(g):
        base = g * K
        for j in range(K):                         # static unroll
            row = pl.multiple_of((base + j) * B, B)
            h_prev = hist_ref[(j + K - 1) % K]                     # h_{t-1}

            # dynamic fractional-memory parameter d_t in (0, 0.5)
            d = 0.5 * jax.nn.sigmoid(
                xpd_ref[pl.ds(row, B), :]
                + jnp.dot(h_prev, ud_ref[...],
                          preferred_element_type=jnp.float32))

            # m_t = sum_{k=1..K} w_k * h_{t-k}  (fractional filter weights)
            m = d * h_prev                                         # w_1 = d
            w = d * (1.0 - d) * 0.5
            for k in range(1, K):
                m = m + w * hist_ref[(j + K - 1 - k) % K]          # h_{t-1-k}
                w = w * ((k + 1) - d) * (1.0 / (k + 2))

            h_new = jnp.tanh(
                xph_ref[pl.ds(row, B), :]
                + jnp.dot(m, uh_ref[...],
                          preferred_element_type=jnp.float32))

            hist_ref[j] = h_new                        # overwrite h_{t-K}

            # Fused output projection: o_t = h_t W_o + b_o (lane-dense store,
            # runs on the otherwise-idle MXU between recurrent matmuls).
            out_ref[pl.ds(row, B), :] = (
                jnp.dot(h_new, wo_ref[...],
                        preferred_element_type=jnp.float32) + bo)

    # ---- Final hidden history, newest-first: hfin[j] = h_{T-1-j}.  T % K == 0
    # makes these slots static; written once at the last chunk only.
    @pl.when(c == pl.num_programs(0) - 1)
    def _():
        for j in range(K):
            hfin_ref[j] = hist_ref[K - 1 - j]


def _mrnn_pallas(x2d, wd, wh, bd, bh, ud, uh, wo, bo, *, K, TC, B_pad):
    TB, I = x2d.shape
    H = ud.shape[0]
    O = wo.shape[1]
    n_chunks = TB // (TC * B_pad)
    kernel = functools.partial(mrnn_fused_kernel, K=K, TC=TC)
    return pl.pallas_call(
        kernel,
        out_shape=(jax.ShapeDtypeStruct((TB, O), jnp.float32),
                   jax.ShapeDtypeStruct((K, B_pad, H), jnp.float32)),
        grid_spec=pltpu.PrefetchScalarGridSpec(
            num_scalar_prefetch=0,
            grid=(n_chunks,),
            in_specs=[
                # streamed input time-chunk (double-buffered by Pallas)
                pl.BlockSpec((TC * B_pad, I), lambda c: (c, 0)),
                # resident weights (block index constant -> fetched once)
                pl.BlockSpec((I, H), lambda c: (0, 0)),   # W_d
                pl.BlockSpec((I, H), lambda c: (0, 0)),   # W_h
                pl.BlockSpec((1, H), lambda c: (0, 0)),   # b_d
                pl.BlockSpec((1, H), lambda c: (0, 0)),   # b_h
                pl.BlockSpec((H, H), lambda c: (0, 0)),   # U_d
                pl.BlockSpec((H, H), lambda c: (0, 0)),   # U_h
                pl.BlockSpec((H, O), lambda c: (0, 0)),   # W_o
                pl.BlockSpec((1, O), lambda c: (0, 0)),   # b_o
            ],
            out_specs=[
                pl.BlockSpec((TC * B_pad, O), lambda c: (c, 0)),
                pl.BlockSpec((K, B_pad, H), lambda c: (0, 0, 0)),
            ],
            scratch_shapes=[
                pltpu.VMEM((K, B_pad, H), jnp.float32),        # circular hist
                pltpu.VMEM((TC * B_pad, H), jnp.float32),      # xpd chunk
                pltpu.VMEM((TC * B_pad, H), jnp.float32),      # xph chunk
            ],
        ),
        compiler_params=pltpu.CompilerParams(
            # Serial carry through hist scratch -> time-chunk axis is serial.
            # TODO(synk): on v7x, add a leading "parallel" batch/series-shard
            # axis to occupy the second TensorCore for batched workloads.
            dimension_semantics=("arbitrary",),
            vmem_limit_bytes=32 * 1024 * 1024,   # explicit, with headroom;
                                                 # safe on v5e/v6e/v7x.
        ),
    )(x2d, wd, wh, bd, bh, ud, uh, wo, bo)


def mrnn_forward(inputs, params, K, time_chunk=None):
    """inputs: (T, B, input_size) f32. Returns (outputs (T,B,O), h_final (K,B,H))."""
    T, B, I = inputs.shape
    H = params["W_h"].shape[1]
    O = params["W_o"].shape[1]
    if T % K != 0:
        # TODO(synk): general T would need a dynamic-slot tail chunk.
        raise ValueError("this implementation requires T % K == 0")

    # Pad to TPU-native tiles: f32 sublane=8 (batch rows), lane=128 (hidden /
    # output columns).  Zero-padded weights keep the padded lanes exactly zero,
    # so results in the logical slice are unchanged.
    B_p = _round_up(B, 8)
    H_p = _round_up(H, 128)
    O_p = _round_up(O, 128)

    if time_chunk is None:
        time_chunk = _pick_time_chunk(T, K, B_p, H_p)
    TC = time_chunk
    if TC % K != 0 or T % TC != 0:
        raise ValueError("time_chunk must be a multiple of K and divide T")

    x = _pad_to(inputs.astype(jnp.float32), (T, B_p, I)).reshape(T * B_p, I)
    wd = _pad_to(params["W_d"], (I, H_p))
    wh = _pad_to(params["W_h"], (I, H_p))
    bd = _pad_to(params["b_d"], (1, H_p))
    bh = _pad_to(params["b_h"], (1, H_p))
    ud = _pad_to(params["U_d"], (H_p, H_p))
    uh = _pad_to(params["U_h"], (H_p, H_p))
    wo = _pad_to(params["W_o"], (H_p, O_p))
    bo = _pad_to(params["b_o"], (1, O_p))

    out_p, hfin_p = _mrnn_pallas(x, wd, wh, bd, bh, ud, uh, wo, bo,
                                 K=K, TC=TC, B_pad=B_p)
    outputs = out_p.reshape(T, B_p, O_p)[:, :B, :O]
    h_final = hfin_p[:, :B, :H]
    return outputs, h_final


def mrnn_ref(inputs, params, K):
    """Pure-JAX reference of the same cell, for correctness checking."""
    T, B, _ = inputs.shape
    H = params["W_h"].shape[1]
    hist = jnp.zeros((K, B, H), jnp.float32)
    outs = []
    for t in range(T):
        xt = inputs[t]
        h_prev = hist[0]
        d = 0.5 * jax.nn.sigmoid(xt @ params["W_d"] + h_prev @ params["U_d"]
                                 + params["b_d"])
        m = jnp.zeros_like(h_prev)
        w = d
        for k in range(K):
            m = m + w * hist[k]
            w = w * ((k + 1) - d) * (1.0 / (k + 2))
        h_new = jnp.tanh(xt @ params["W_h"] + m @ params["U_h"] + params["b_h"])
        outs.append(h_new @ params["W_o"] + params["b_o"])
        hist = jnp.concatenate([h_new[None], hist[:K - 1]], axis=0)
    return jnp.stack(outs), hist


def init_params(key, input_size, hidden_size, output_size):
    ks = jax.random.split(key, 8)
    s_i = 1.0 / jnp.sqrt(input_size)
    s_h = 1.0 / jnp.sqrt(hidden_size)
    return {
        "W_d": s_i * jax.random.normal(ks[0], (input_size, hidden_size), jnp.float32),
        "U_d": s_h * jax.random.normal(ks[1], (hidden_size, hidden_size), jnp.float32),
        "b_d": s_h * jax.random.normal(ks[2], (1, hidden_size), jnp.float32),
        "W_h": s_i * jax.random.normal(ks[3], (input_size, hidden_size), jnp.float32),
        "U_h": s_h * jax.random.normal(ks[4], (hidden_size, hidden_size), jnp.float32),
        "b_h": s_h * jax.random.normal(ks[5], (1, hidden_size), jnp.float32),
        "W_o": s_h * jax.random.normal(ks[6], (hidden_size, output_size), jnp.float32),
        "b_o": s_h * jax.random.normal(ks[7], (1, output_size), jnp.float32),
    }


if __name__ == "__main__":
    T, B = 8, 2                      # time_steps, batch_size
    input_size, hidden_size, output_size, K = 4, 32, 4, 4

    key = jax.random.PRNGKey(0)
    inputs = jax.random.normal(key, (T, B, input_size), jnp.float32)
    params = init_params(jax.random.PRNGKey(42), input_size, hidden_size, output_size)

    # time_chunk=K exercises the streamed multi-chunk path (grid=(2,)) with the
    # K-deep circular hidden history persisting in VMEM scratch across chunks.
    fwd = jax.jit(functools.partial(mrnn_forward, K=K, time_chunk=K))
    outputs, h_final = fwd(inputs, params)
    outputs = jax.block_until_ready(outputs)
    h_final = jax.block_until_ready(h_final)

    ref_out, ref_h = mrnn_ref(inputs, params, K)
    assert outputs.shape == (T, B, output_size)
    assert h_final.shape == (K, B, hidden_size)
    assert jnp.allclose(outputs, ref_out, atol=1e-5, rtol=1e-5)
    assert jnp.allclose(h_final, ref_h, atol=1e-5, rtol=1e-5)

    print("KERNEL_OK")
</pallas_src>

<mosaic_0001>
module attributes {stable_mosaic.version = 11 : i64} {
  func.func @mrnn_fused_kernel(%arg0: i32, %arg1: memref<32x4xf32, #tpu.memory_space<vmem>>, %arg2: memref<4x128xf32, #tpu.memory_space<vmem>>, %arg3: memref<4x128xf32, #tpu.memory_space<vmem>>, %arg4: memref<1x128xf32, #tpu.memory_space<vmem>>, %arg5: memref<1x128xf32, #tpu.memory_space<vmem>>, %arg6: memref<128x128xf32, #tpu.memory_space<vmem>>, %arg7: memref<128x128xf32, #tpu.memory_space<vmem>>, %arg8: memref<128x128xf32, #tpu.memory_space<vmem>>, %arg9: memref<1x128xf32, #tpu.memory_space<vmem>>, %arg10: memref<32x128xf32, #tpu.memory_space<vmem>>, %arg11: memref<4x8x128xf32, #tpu.memory_space<vmem>>, %arg12: memref<4x8x128xf32, #tpu.memory_space<vmem>>, %arg13: memref<32x128xf32, #tpu.memory_space<vmem>>, %arg14: memref<32x128xf32, #tpu.memory_space<vmem>>) attributes {dimension_semantics = [#tpu.dimension_semantics<arbitrary>], iteration_bounds = array<i64: 2>, scalar_prefetch = 0 : i64, scratch_operands = 3 : i64, tpu.core_type = #tpu.core_type<tc>, window_params = [{transform_indices = @transform_0, window_bounds = array<i64: 32, 4>}, {pipeline_mode = #tpu.pipeline_mode<synchronous>, transform_indices = @transform_1, window_bounds = array<i64: 4, 128>}, {pipeline_mode = #tpu.pipeline_mode<synchronous>, transform_indices = @transform_2, window_bounds = array<i64: 4, 128>}, {pipeline_mode = #tpu.pipeline_mode<synchronous>, transform_indices = @transform_3, window_bounds = array<i64: 1, 128>}, {pipeline_mode = #tpu.pipeline_mode<synchronous>, transform_indices = @transform_4, window_bounds = array<i64: 1, 128>}, {pipeline_mode = #tpu.pipeline_mode<synchronous>, transform_indices = @transform_5, window_bounds = array<i64: 128, 128>}, {pipeline_mode = #tpu.pipeline_mode<synchronous>, transform_indices = @transform_6, window_bounds = array<i64: 128, 128>}, {pipeline_mode = #tpu.pipeline_mode<synchronous>, transform_indices = @transform_7, window_bounds = array<i64: 128, 128>}, {pipeline_mode = #tpu.pipeline_mode<synchronous>, transform_indices = @transform_8, window_bounds = array<i64: 1, 128>}, {transform_indices = @transform_9, window_bounds = array<i64: 32, 128>}, {pipeline_mode = #tpu.pipeline_mode<synchronous>, transform_indices = @transform_10, window_bounds = array<i64: 4, 8, 128>}]} {
    %c0_i32 = arith.constant 0 : i32
    %0 = arith.cmpi eq, %arg0, %c0_i32 : i32
    %1 = arith.extui %0 : i1 to i32
    %c0_i32_0 = arith.constant 0 : i32
    %2 = arith.cmpi ne, %1, %c0_i32_0 : i32
    scf.if %2 {
      %cst_164 = arith.constant 0.000000e+00 : f32
      %261 = vector.broadcast %cst_164 : f32 to vector<4x8x128xf32>
      %c0_165 = arith.constant 0 : index
      %c0_166 = arith.constant 0 : index
      %c0_167 = arith.constant 0 : index
      %262 = vector.load %arg12[%c0_165, %c0_166, %c0_167] : memref<4x8x128xf32, #tpu.memory_space<vmem>>, vector<4x8x128xf32>
      tpu.vector_store %arg12[%c0_165, %c0_166, %c0_167], %261 {strides = array<i32>} : memref<4x8x128xf32, #tpu.memory_space<vmem>>, vector<4x8x128xf32>,
    } else {
    }
    %c0 = arith.constant 0 : index
    %c0_1 = arith.constant 0 : index
    %3 = vector.load %arg1[%c0, %c0_1] : memref<32x4xf32, #tpu.memory_space<vmem>>, vector<32x4xf32>
    %c0_2 = arith.constant 0 : index
    %c0_3 = arith.constant 0 : index
    %4 = vector.load %arg2[%c0_2, %c0_3] : memref<4x128xf32, #tpu.memory_space<vmem>>, vector<4x128xf32>
    %cst = arith.constant dense<0.000000e+00> : vector<32x128xf32>
    %5 = tpu.matmul %3, %4, %cst {dimension_numbers = #tpu.dot_dimension_numbers<[1], [0], [0], [1], [0, 0, 1, 1], [], []>} : vector<32x4xf32>, vector<4x128xf32>, vector<32x128xf32> -> vector<32x128xf32>
    %c0_4 = arith.constant 0 : index
    %c0_5 = arith.constant 0 : index
    %6 = vector.load %arg4[%c0_4, %c0_5] : memref<1x128xf32, #tpu.memory_space<vmem>>, vector<1x128xf32>
    %7 = vector.broadcast %6 : vector<1x128xf32> to vector<32x128xf32>
    %8 = arith.addf %5, %7 : vector<32x128xf32>
    %c0_6 = arith.constant 0 : index
    %c0_7 = arith.constant 0 : index
    %9 = vector.load %arg13[%c0_6, %c0_7] : memref<32x128xf32, #tpu.memory_space<vmem>>, vector<32x128xf32>
    tpu.vector_store %arg13[%c0_6, %c0_7], %8 {strides = array<i32>} : memref<32x128xf32, #tpu.memory_space<vmem>>, vector<32x128xf32>,
    %c0_8 = arith.constant 0 : index
    %c0_9 = arith.constant 0 : index
    %10 = vector.load %arg3[%c0_8, %c0_9] : memref<4x128xf32, #tpu.memory_space<vmem>>, vector<4x128xf32>
    %cst_10 = arith.constant dense<0.000000e+00> : vector<32x128xf32>
    %11 = tpu.matmul %3, %10, %cst_10 {dimension_numbers = #tpu.dot_dimension_numbers<[1], [0], [0], [1], [0, 0, 1, 1], [], []>} : vector<32x4xf32>, vector<4x128xf32>, vector<32x128xf32> -> vector<32x128xf32>
    %c0_11 = arith.constant 0 : index
    %c0_12 = arith.constant 0 : index
    %12 = vector.load %arg5[%c0_11, %c0_12] : memref<1x128xf32, #tpu.memory_space<vmem>>, vector<1x128xf32>
    %13 = vector.broadcast %12 : vector<1x128xf32> to vector<32x128xf32>
    %14 = arith.addf %11, %13 : vector<32x128xf32>
    %c0_13 = arith.constant 0 : index
    %c0_14 = arith.constant 0 : index
    %15 = vector.load %arg14[%c0_13, %c0_14] : memref<32x128xf32, #tpu.memory_space<vmem>>, vector<32x128xf32>
    tpu.vector_store %arg14[%c0_13, %c0_14], %14 {strides = array<i32>} : memref<32x128xf32, #tpu.memory_space<vmem>>, vector<32x128xf32>,
    %c0_15 = arith.constant 0 : index
    %c0_16 = arith.constant 0 : index
    %16 = vector.load %arg9[%c0_15, %c0_16] : memref<1x128xf32, #tpu.memory_space<vmem>>, vector<1x128xf32>
    %17 = vector.shape_cast %16 : vector<1x128xf32> to vector<1x128xf32>
    %18 = vector.broadcast %17 : vector<1x128xf32> to vector<8x128xf32>
    %c0_i32_17 = arith.constant 0 : i32
    %c1_i32 = arith.constant 1 : i32
    %19 = arith.muli %c0_i32_17, %c1_i32 : i32
    %c0_i32_18 = arith.constant 0 : i32
    %20 = arith.addi %c0_i32_18, %19 : i32
    %c4_i32 = arith.constant 4 : i32
    %21 = arith.muli %20, %c4_i32 : i32
    %c0_i32_19 = arith.constant 0 : i32
    %22 = arith.addi %21, %c0_i32_19 : i32
    %c8_i32 = arith.constant 8 : i32
    %23 = arith.muli %22, %c8_i32 : i32
    %24 = tpu.assume_multiple %23, 8 : i32
    %c3 = arith.constant 3 : index
    %c0_20 = arith.constant 0 : index
    %c0_21 = arith.constant 0 : index
    %25 = vector.load %arg12[%c3, %c0_20, %c0_21] : memref<4x8x128xf32, #tpu.memory_space<vmem>>, vector<1x8x128xf32>
    %26 = vector.shape_cast %25 : vector<1x8x128xf32> to vector<8x128xf32>
    %27 = arith.index_cast %24 : i32 to index
    %c0_22 = arith.constant 0 : index
    %28 = vector.load %arg13[%27, %c0_22] : memref<32x128xf32, #tpu.memory_space<vmem>>, vector<8x128xf32>
    %c0_23 = arith.constant 0 : index
    %c0_24 = arith.constant 0 : index
    %29 = vector.load %arg6[%c0_23, %c0_24] : memref<128x128xf32, #tpu.memory_space<vmem>>, vector<128x128xf32>
    %cst_25 = arith.constant dense<0.000000e+00> : vector<8x128xf32>
    %30 = tpu.matmul %26, %29, %cst_25 {dimension_numbers = #tpu.dot_dimension_numbers<[1], [0], [0], [1], [0, 0, 1, 1], [], []>} : vector<8x128xf32>, vector<128x128xf32>, vector<8x128xf32> -> vector<8x128xf32>
    %31 = arith.addf %28, %30 : vector<8x128xf32>
    %32 = arith.negf %31 : vector<8x128xf32>
    %33 = math.exp %32 : vector<8x128xf32>
    %cst_26 = arith.constant 1.000000e+00 : f32
    %34 = vector.broadcast %cst_26 : f32 to vector<8x128xf32>
    %35 = arith.addf %34, %33 : vector<8x128xf32>
    %36 = arith.divf %34, %35 : vector<8x128xf32>
    %cst_27 = arith.constant 5.000000e-01 : f32
    %37 = vector.broadcast %cst_27 : f32 to vector<8x128xf32>
    %38 = arith.mulf %37, %36 : vector<8x128xf32>
    %39 = arith.mulf %38, %26 : vector<8x128xf32>
    %cst_28 = arith.constant 1.000000e+00 : f32
    %40 = vector.broadcast %cst_28 : f32 to vector<8x128xf32>
    %41 = arith.subf %40, %38 : vector<8x128xf32>
    %42 = arith.mulf %38, %41 : vector<8x128xf32>
    %cst_29 = arith.constant 5.000000e-01 : f32
    %43 = vector.broadcast %cst_29 : f32 to vector<8x128xf32>
    %44 = arith.mulf %42, %43 : vector<8x128xf32>
    %c2 = arith.constant 2 : index
    %c0_30 = arith.constant 0 : index
    %c0_31 = arith.constant 0 : index
    %45 = vector.load %arg12[%c2, %c0_30, %c0_31] : memref<4x8x128xf32, #tpu.memory_space<vmem>>, vector<1x8x128xf32>
    %46 = vector.shape_cast %45 : vector<1x8x128xf32> to vector<8x128xf32>
    %47 = arith.mulf %44, %46 : vector<8x128xf32>
    %48 = arith.addf %39, %47 : vector<8x128xf32>
    %cst_32 = arith.constant 2.000000e+00 : f32
    %49 = vector.broadcast %cst_32 : f32 to vector<8x128xf32>
    %50 = arith.subf %49, %38 : vector<8x128xf32>
    %51 = arith.mulf %44, %50 : vector<8x128xf32>
    %cst_33 = arith.constant 0.333333343 : f32
    %52 = vector.broadcast %cst_33 : f32 to vector<8x128xf32>
    %53 = arith.mulf %51, %52 : vector<8x128xf32>
    %c1 = arith.constant 1 : index
    %c0_34 = arith.constant 0 : index
    %c0_35 = arith.constant 0 : index
    %54 = vector.load %arg12[%c1, %c0_34, %c0_35] : memref<4x8x128xf32, #tpu.memory_space<vmem>>, vector<1x8x128xf32>
    %55 = vector.shape_cast %54 : vector<1x8x128xf32> to vector<8x128xf32>
    %56 = arith.mulf %53, %55 : vector<8x128xf32>
    %57 = arith.addf %48, %56 : vector<8x128xf32>
    %cst_36 = arith.constant 3.000000e+00 : f32
    %58 = vector.broadcast %cst_36 : f32 to vector<8x128xf32>
    %59 = arith.subf %58, %38 : vector<8x128xf32>
    %60 = arith.mulf %53, %59 : vector<8x128xf32>
    %cst_37 = arith.constant 2.500000e-01 : f32
    %61 = vector.broadcast %cst_37 : f32 to vector<8x128xf32>
    %62 = arith.mulf %60, %61 : vector<8x128xf32>
    %c0_38 = arith.constant 0 : index
    %c0_39 = arith.constant 0 : index
    %c0_40 = arith.constant 0 : index
    %63 = vector.load %arg12[%c0_38, %c0_39, %c0_40] : memref<4x8x128xf32, #tpu.memory_space<vmem>>, vector<1x8x128xf32>
    %64 = vector.shape_cast %63 : vector<1x8x128xf32> to vector<8x128xf32>
    %65 = arith.mulf %62, %64 : vector<8x128xf32>
    %66 = arith.addf %57, %65 : vector<8x128xf32>
    %67 = arith.index_cast %24 : i32 to index
    %c0_41 = arith.constant 0 : index
    %68 = vector.load %arg14[%67, %c0_41] : memref<32x128xf32, #tpu.memory_space<vmem>>, vector<8x128xf32>
    %c0_42 = arith.constant 0 : index
    %c0_43 = arith.constant 0 : index
    %69 = vector.load %arg7[%c0_42, %c0_43] : memref<128x128xf32, #tpu.memory_space<vmem>>, vector<128x128xf32>
    %cst_44 = arith.constant dense<0.000000e+00> : vector<8x128xf32>
    %70 = tpu.matmul %66, %69, %cst_44 {dimension_numbers = #tpu.dot_dimension_numbers<[1], [0], [0], [1], [0, 0, 1, 1], [], []>} : vector<8x128xf32>, vector<128x128xf32>, vector<8x128xf32> -> vector<8x128xf32>
    %71 = arith.addf %68, %70 : vector<8x128xf32>
    %72 = math.tanh %71 : vector<8x128xf32>
    %c0_45 = arith.constant 0 : index
    %c0_46 = arith.constant 0 : index
    %c0_47 = arith.constant 0 : index
    %73 = vector.load %arg12[%c0_45, %c0_46, %c0_47] : memref<4x8x128xf32, #tpu.memory_space<vmem>>, vector<1x8x128xf32>
    %74 = vector.shape_cast %73 : vector<1x8x128xf32> to vector<8x128xf32>
    %75 = vector.shape_cast %72 : vector<8x128xf32> to vector<1x8x128xf32>
    tpu.vector_store %arg12[%c0_45, %c0_46, %c0_47], %75 {strides = array<i32>} : memref<4x8x128xf32, #tpu.memory_space<vmem>>, vector<1x8x128xf32>,
    %c0_48 = arith.constant 0 : index
    %c0_49 = arith.constant 0 : index
    %76 = vector.load %arg8[%c0_48, %c0_49] : memref<128x128xf32, #tpu.memory_space<vmem>>, vector<128x128xf32>
    %cst_50 = arith.constant dense<0.000000e+00> : vector<8x128xf32>
    %77 = tpu.matmul %72, %76, %cst_50 {dimension_numbers = #tpu.dot_dimension_numbers<[1], [0], [0], [1], [0, 0, 1, 1], [], []>} : vector<8x128xf32>, vector<128x128xf32>, vector<8x128xf32> -> vector<8x128xf32>
    %78 = arith.addf %77, %18 : vector<8x128xf32>
    %79 = arith.index_cast %24 : i32 to index
    %c0_51 = arith.constant 0 : index
    %80 = vector.load %arg10[%79, %c0_51] : memref<32x128xf32, #tpu.memory_space<vmem>>, vector<8x128xf32>
    tpu.vector_store %arg10[%79, %c0_51], %78 {strides = array<i32>} : memref<32x128xf32, #tpu.memory_space<vmem>>, vector<8x128xf32>,
    %c1_i32_52 = arith.constant 1 : i32
    %81 = arith.addi %21, %c1_i32_52 : i32
    %c8_i32_53 = arith.constant 8 : i32
    %82 = arith.muli %81, %c8_i32_53 : i32
    %83 = tpu.assume_multiple %82, 8 : i32
    %c0_54 = arith.constant 0 : index
    %c0_55 = arith.constant 0 : index
    %c0_56 = arith.constant 0 : index
    %84 = vector.load %arg12[%c0_54, %c0_55, %c0_56] : memref<4x8x128xf32, #tpu.memory_space<vmem>>, vector<1x8x128xf32>
    %85 = vector.shape_cast %84 : vector<1x8x128xf32> to vector<8x128xf32>
    %86 = arith.index_cast %83 : i32 to index
    %c0_57 = arith.constant 0 : index
    %87 = vector.load %arg13[%86, %c0_57] : memref<32x128xf32, #tpu.memory_space<vmem>>, vector<8x128xf32>
    %c0_58 = arith.constant 0 : index
    %c0_59 = arith.constant 0 : index
    %88 = vector.load %arg6[%c0_58, %c0_59] : memref<128x128xf32, #tpu.memory_space<vmem>>, vector<128x128xf32>
    %cst_60 = arith.constant dense<0.000000e+00> : vector<8x128xf32>
    %89 = tpu.matmul %85, %88, %cst_60 {dimension_numbers = #tpu.dot_dimension_numbers<[1], [0], [0], [1], [0, 0, 1, 1], [], []>} : vector<8x128xf32>, vector<128x128xf32>, vector<8x128xf32> -> vector<8x128xf32>
    %90 = arith.addf %87, %89 : vector<8x128xf32>
    %91 = arith.negf %90 : vector<8x128xf32>
    %92 = math.exp %91 : vector<8x128xf32>
    %cst_61 = arith.constant 1.000000e+00 : f32
    %93 = vector.broadcast %cst_61 : f32 to vector<8x128xf32>
    %94 = arith.addf %93, %92 : vector<8x128xf32>
    %95 = arith.divf %93, %94 : vector<8x128xf32>
    %cst_62 = arith.constant 5.000000e-01 : f32
    %96 = vector.broadcast %cst_62 : f32 to vector<8x128xf32>
    %97 = arith.mulf %96, %95 : vector<8x128xf32>
    %98 = arith.mulf %97, %85 : vector<8x128xf32>
    %cst_63 = arith.constant 1.000000e+00 : f32
    %99 = vector.broadcast %cst_63 : f32 to vector<8x128xf32>
    %100 = arith.subf %99, %97 : vector<8x128xf32>
    %101 = arith.mulf %97, %100 : vector<8x128xf32>
    %cst_64 = arith.constant 5.000000e-01 : f32
    %102 = vector.broadcast %cst_64 : f32 to vector<8x128xf32>
    %103 = arith.mulf %101, %102 : vector<8x128xf32>
    %c3_65 = arith.constant 3 : index
    %c0_66 = arith.constant 0 : index
    %c0_67 = arith.constant 0 : index
    %104 = vector.load %arg12[%c3_65, %c0_66, %c0_67] : memref<4x8x128xf32, #tpu.memory_space<vmem>>, vector<1x8x128xf32>
    %105 = vector.shape_cast %104 : vector<1x8x128xf32> to vector<8x128xf32>
    %106 = arith.mulf %103, %105 : vector<8x128xf32>
    %107 = arith.addf %98, %106 : vector<8x128xf32>
    %cst_68 = arith.constant 2.000000e+00 : f32
    %108 = vector.broadcast %cst_68 : f32 to vector<8x128xf32>
    %109 = arith.subf %108, %97 : vector<8x128xf32>
    %110 = arith.mulf %103, %109 : vector<8x128xf32>
    %cst_69 = arith.constant 0.333333343 : f32
    %111 = vector.broadcast %cst_69 : f32 to vector<8x128xf32>
    %112 = arith.mulf %110, %111 : vector<8x128xf32>
    %c2_70 = arith.constant 2 : index
    %c0_71 = arith.constant 0 : index
    %c0_72 = arith.constant 0 : index
    %113 = vector.load %arg12[%c2_70, %c0_71, %c0_72] : memref<4x8x128xf32, #tpu.memory_space<vmem>>, vector<1x8x128xf32>
    %114 = vector.shape_cast %113 : vector<1x8x128xf32> to vector<8x128xf32>
    %115 = arith.mulf %112, %114 : vector<8x128xf32>
    %116 = arith.addf %107, %115 : vector<8x128xf32>
    %cst_73 = arith.constant 3.000000e+00 : f32
    %117 = vector.broadcast %cst_73 : f32 to vector<8x128xf32>
    %118 = arith.subf %117, %97 : vector<8x128xf32>
    %119 = arith.mulf %112, %118 : vector<8x128xf32>
    %cst_74 = arith.constant 2.500000e-01 : f32
    %120 = vector.broadcast %cst_74 : f32 to vector<8x128xf32>
    %121 = arith.mulf %119, %120 : vector<8x128xf32>
    %c1_75 = arith.constant 1 : index
    %c0_76 = arith.constant 0 : index
    %c0_77 = arith.constant 0 : index
    %122 = vector.load %arg12[%c1_75, %c0_76, %c0_77] : memref<4x8x128xf32, #tpu.memory_space<vmem>>, vector<1x8x128xf32>
    %123 = vector.shape_cast %122 : vector<1x8x128xf32> to vector<8x128xf32>
    %124 = arith.mulf %121, %123 : vector<8x128xf32>
    %125 = arith.addf %116, %124 : vector<8x128xf32>
    %126 = arith.index_cast %83 : i32 to index
    %c0_78 = arith.constant 0 : index
    %127 = vector.load %arg14[%126, %c0_78] : memref<32x128xf32, #tpu.memory_space<vmem>>, vector<8x128xf32>
    %c0_79 = arith.constant 0 : index
    %c0_80 = arith.constant 0 : index
    %128 = vector.load %arg7[%c0_79, %c0_80] : memref<128x128xf32, #tpu.memory_space<vmem>>, vector<128x128xf32>
    %cst_81 = arith.constant dense<0.000000e+00> : vector<8x128xf32>
    %129 = tpu.matmul %125, %128, %cst_81 {dimension_numbers = #tpu.dot_dimension_numbers<[1], [0], [0], [1], [0, 0, 1, 1], [], []>} : vector<8x128xf32>, vector<128x128xf32>, vector<8x128xf32> -> vector<8x128xf32>
    %130 = arith.addf %127, %129 : vector<8x128xf32>
    %131 = math.tanh %130 : vector<8x128xf32>
    %c1_82 = arith.constant 1 : index
    %c0_83 = arith.constant 0 : index
    %c0_84 = arith.constant 0 : index
    %132 = vector.load %arg12[%c1_82, %c0_83, %c0_84] : memref<4x8x128xf32, #tpu.memory_space<vmem>>, vector<1x8x128xf32>
    %133 = vector.shape_cast %132 : vector<1x8x128xf32> to vector<8x128xf32>
    %134 = vector.shape_cast %131 : vector<8x128xf32> to vector<1x8x128xf32>
    tpu.vector_store %arg12[%c1_82, %c0_83, %c0_84], %134 {strides = array<i32>} : memref<4x8x128xf32, #tpu.memory_space<vmem>>, vector<1x8x128xf32>,
    %c0_85 = arith.constant 0 : index
    %c0_86 = arith.constant 0 : index
    %135 = vector.load %arg8[%c0_85, %c0_86] : memref<128x128xf32, #tpu.memory_space<vmem>>, vector<128x128xf32>
    %cst_87 = arith.constant dense<0.000000e+00> : vector<8x128xf32>
    %136 = tpu.matmul %131, %135, %cst_87 {dimension_numbers = #tpu.dot_dimension_numbers<[1], [0], [0], [1], [0, 0, 1, 1], [], []>} : vector<8x128xf32>, vector<128x128xf32>, vector<8x128xf32> -> vector<8x128xf32>
    %137 = arith.addf %136, %18 : vector<8x128xf32>
    %138 = arith.index_cast %83 : i32 to index
    %c0_88 = arith.constant 0 : index
    %139 = vector.load %arg10[%138, %c0_88] : memref<32x128xf32, #tpu.memory_space<vmem>>, vector<8x128xf32>
    tpu.vector_store %arg10[%138, %c0_88], %137 {strides = array<i32>} : memref<32x128xf32, #tpu.memory_space<vmem>>, vector<8x128xf32>,
    %c2_i32 = arith.constant 2 : i32
    %140 = arith.addi %21, %c2_i32 : i32
    %c8_i32_89 = arith.constant 8 : i32
    %141 = arith.muli %140, %c8_i32_89 : i32
    %142 = tpu.assume_multiple %141, 8 : i32
    %c1_90 = arith.constant 1 : index
    %c0_91 = arith.constant 0 : index
    %c0_92 = arith.constant 0 : index
    %143 = vector.load %arg12[%c1_90, %c0_91, %c0_92] : memref<4x8x128xf32, #tpu.memory_space<vmem>>, vector<1x8x128xf32>
    %144 = vector.shape_cast %143 : vector<1x8x128xf32> to vector<8x128xf32>
    %145 = arith.index_cast %142 : i32 to index
    %c0_93 = arith.constant 0 : index
    %146 = vector.load %arg13[%145, %c0_93] : memref<32x128xf32, #tpu.memory_space<vmem>>, vector<8x128xf32>
    %c0_94 = arith.constant 0 : index
    %c0_95 = arith.constant 0 : index
    %147 = vector.load %arg6[%c0_94, %c0_95] : memref<128x128xf32, #tpu.memory_space<vmem>>, vector<128x128xf32>
    %cst_96 = arith.constant dense<0.000000e+00> : vector<8x128xf32>
    %148 = tpu.matmul %144, %147, %cst_96 {dimension_numbers = #tpu.dot_dimension_numbers<[1], [0], [0], [1], [0, 0, 1, 1], [], []>} : vector<8x128xf32>, vector<128x128xf32>, vector<8x128xf32> -> vector<8x128xf32>
    %149 = arith.addf %146, %148 : vector<8x128xf32>
    %150 = arith.negf %149 : vector<8x128xf32>
    %151 = math.exp %150 : vector<8x128xf32>
    %cst_97 = arith.constant 1.000000e+00 : f32
    %152 = vector.broadcast %cst_97 : f32 to vector<8x128xf32>
    %153 = arith.addf %152, %151 : vector<8x128xf32>
    %154 = arith.divf %152, %153 : vector<8x128xf32>
    %cst_98 = arith.constant 5.000000e-01 : f32
    %155 = vector.broadcast %cst_98 : f32 to vector<8x128xf32>
    %156 = arith.mulf %155, %154 : vector<8x128xf32>
    %157 = arith.mulf %156, %144 : vector<8x128xf32>
    %cst_99 = arith.constant 1.000000e+00 : f32
    %158 = vector.broadcast %cst_99 : f32 to vector<8x128xf32>
    %159 = arith.subf %158, %156 : vector<8x128xf32>
    %160 = arith.mulf %156, %159 : vector<8x128xf32>
    %cst_100 = arith.constant 5.000000e-01 : f32
    %161 = vector.broadcast %cst_100 : f32 to vector<8x128xf32>
    %162 = arith.mulf %160, %161 : vector<8x128xf32>
    %c0_101 = arith.constant 0 : index
    %c0_102 = arith.constant 0 : index
    %c0_103 = arith.constant 0 : index
    %163 = vector.load %arg12[%c0_101, %c0_102, %c0_103] : memref<4x8x128xf32, #tpu.memory_space<vmem>>, vector<1x8x128xf32>
    %164 = vector.shape_cast %163 : vector<1x8x128xf32> to vector<8x128xf32>
    %165 = arith.mulf %162, %164 : vector<8x128xf32>
    %166 = arith.addf %157, %165 : vector<8x128xf32>
    %cst_104 = arith.constant 2.000000e+00 : f32
    %167 = vector.broadcast %cst_104 : f32 to vector<8x128xf32>
    %168 = arith.subf %167, %156 : vector<8x128xf32>
    %169 = arith.mulf %162, %168 : vector<8x128xf32>
    %cst_105 = arith.constant 0.333333343 : f32
    %170 = vector.broadcast %cst_105 : f32 to vector<8x128xf32>
    %171 = arith.mulf %169, %170 : vector<8x128xf32>
    %c3_106 = arith.constant 3 : index
    %c0_107 = arith.constant 0 : index
    %c0_108 = arith.constant 0 : index
    %172 = vector.load %arg12[%c3_106, %c0_107, %c0_108] : memref<4x8x128xf32, #tpu.memory_space<vmem>>, vector<1x8x128xf32>
    %173 = vector.shape_cast %172 : vector<1x8x128xf32> to vector<8x128xf32>
    %174 = arith.mulf %171, %173 : vector<8x128xf32>
    %175 = arith.addf %166, %174 : vector<8x128xf32>
    %cst_109 = arith.constant 3.000000e+00 : f32
    %176 = vector.broadcast %cst_109 : f32 to vector<8x128xf32>
    %177 = arith.subf %176, %156 : vector<8x128xf32>
    %178 = arith.mulf %171, %177 : vector<8x128xf32>
    %cst_110 = arith.constant 2.500000e-01 : f32
    %179 = vector.broadcast %cst_110 : f32 to vector<8x128xf32>
    %180 = arith.mulf %178, %179 : vector<8x128xf32>
    %c2_111 = arith.constant 2 : index
    %c0_112 = arith.constant 0 : index
    %c0_113 = arith.constant 0 : index
    %181 = vector.load %arg12[%c2_111, %c0_112, %c0_113] : memref<4x8x128xf32, #tpu.memory_space<vmem>>, vector<1x8x128xf32>
    %182 = vector.shape_cast %181 : vector<1x8x128xf32> to vector<8x128xf32>
    %183 = arith.mulf %180, %182 : vector<8x128xf32>
    %184 = arith.addf %175, %183 : vector<8x128xf32>
    %185 = arith.index_cast %142 : i32 to index
    %c0_114 = arith.constant 0 : index
    %186 = vector.load %arg14[%185, %c0_114] : memref<32x128xf32, #tpu.memory_space<vmem>>, vector<8x128xf32>
    %c0_115 = arith.constant 0 : index
    %c0_116 = arith.constant 0 : index
    %187 = vector.load %arg7[%c0_115, %c0_116] : memref<128x128xf32, #tpu.memory_space<vmem>>, vector<128x128xf32>
    %cst_117 = arith.constant dense<0.000000e+00> : vector<8x128xf32>
    %188 = tpu.matmul %184, %187, %cst_117 {dimension_numbers = #tpu.dot_dimension_numbers<[1], [0], [0], [1], [0, 0, 1, 1], [], []>} : vector<8x128xf32>, vector<128x128xf32>, vector<8x128xf32> -> vector<8x128xf32>
    %189 = arith.addf %186, %188 : vector<8x128xf32>
    %190 = math.tanh %189 : vector<8x128xf32>
    %c2_118 = arith.constant 2 : index
    %c0_119 = arith.constant 0 : index
    %c0_120 = arith.constant 0 : index
    %191 = vector.load %arg12[%c2_118, %c0_119, %c0_120] : memref<4x8x128xf32, #tpu.memory_space<vmem>>, vector<1x8x128xf32>
    %192 = vector.shape_cast %191 : vector<1x8x128xf32> to vector<8x128xf32>
    %193 = vector.shape_cast %190 : vector<8x128xf32> to vector<1x8x128xf32>
    tpu.vector_store %arg12[%c2_118, %c0_119, %c0_120], %193 {strides = array<i32>} : memref<4x8x128xf32, #tpu.memory_space<vmem>>, vector<1x8x128xf32>,
    %c0_121 = arith.constant 0 : index
    %c0_122 = arith.constant 0 : index
    %194 = vector.load %arg8[%c0_121, %c0_122] : memref<128x128xf32, #tpu.memory_space<vmem>>, vector<128x128xf32>
    %cst_123 = arith.constant dense<0.000000e+00> : vector<8x128xf32>
    %195 = tpu.matmul %190, %194, %cst_123 {dimension_numbers = #tpu.dot_dimension_numbers<[1], [0], [0], [1], [0, 0, 1, 1], [], []>} : vector<8x128xf32>, vector<128x128xf32>, vector<8x128xf32> -> vector<8x128xf32>
    %196 = arith.addf %195, %18 : vector<8x128xf32>
    %197 = arith.index_cast %142 : i32 to index
    %c0_124 = arith.constant 0 : index
    %198 = vector.load %arg10[%197, %c0_124] : memref<32x128xf32, #tpu.memory_space<vmem>>, vector<8x128xf32>
    tpu.vector_store %arg10[%197, %c0_124], %196 {strides = array<i32>} : memref<32x128xf32, #tpu.memory_space<vmem>>, vector<8x128xf32>,
    %c3_i32 = arith.constant 3 : i32
    %199 = arith.addi %21, %c3_i32 : i32
    %c8_i32_125 = arith.constant 8 : i32
    %200 = arith.muli %199, %c8_i32_125 : i32
    %201 = tpu.assume_multiple %200, 8 : i32
    %c2_126 = arith.constant 2 : index
    %c0_127 = arith.constant 0 : index
    %c0_128 = arith.constant 0 : index
    %202 = vector.load %arg12[%c2_126, %c0_127, %c0_128] : memref<4x8x128xf32, #tpu.memory_space<vmem>>, vector<1x8x128xf32>
    %203 = vector.shape_cast %202 : vector<1x8x128xf32> to vector<8x128xf32>
    %204 = arith.index_cast %201 : i32 to index
    %c0_129 = arith.constant 0 : index
    %205 = vector.load %arg13[%204, %c0_129] : memref<32x128xf32, #tpu.memory_space<vmem>>, vector<8x128xf32>
    %c0_130 = arith.constant 0 : index
    %c0_131 = arith.constant 0 : index
    %206 = vector.load %arg6[%c0_130, %c0_131] : memref<128x128xf32, #tpu.memory_space<vmem>>, vector<128x128xf32>
    %cst_132 = arith.constant dense<0.000000e+00> : vector<8x128xf32>
    %207 = tpu.matmul %203, %206, %cst_132 {dimension_numbers = #tpu.dot_dimension_numbers<[1], [0], [0], [1], [0, 0, 1, 1], [], []>} : vector<8x128xf32>, vector<128x128xf32>, vector<8x128xf32> -> vector<8x128xf32>
    %208 = arith.addf %205, %207 : vector<8x128xf32>
    %209 = arith.negf %208 : vector<8x128xf32>
    %210 = math.exp %209 : vector<8x128xf32>
    %cst_133 = arith.constant 1.000000e+00 : f32
    %211 = vector.broadcast %cst_133 : f32 to vector<8x128xf32>
    %212 = arith.addf %211, %210 : vector<8x128xf32>
    %213 = arith.divf %211, %212 : vector<8x128xf32>
    %cst_134 = arith.constant 5.000000e-01 : f32
    %214 = vector.broadcast %cst_134 : f32 to vector<8x128xf32>
    %215 = arith.mulf %214, %213 : vector<8x128xf32>
    %216 = arith.mulf %215, %203 : vector<8x128xf32>
    %cst_135 = arith.constant 1.000000e+00 : f32
    %217 = vector.broadcast %cst_135 : f32 to vector<8x128xf32>
    %218 = arith.subf %217, %215 : vector<8x128xf32>
    %219 = arith.mulf %215, %218 : vector<8x128xf32>
    %cst_136 = arith.constant 5.000000e-01 : f32
    %220 = vector.broadcast %cst_136 : f32 to vector<8x128xf32>
    %221 = arith.mulf %219, %220 : vector<8x128xf32>
    %c1_137 = arith.constant 1 : index
    %c0_138 = arith.constant 0 : index
    %c0_139 = arith.constant 0 : index
    %222 = vector.load %arg12[%c1_137, %c0_138, %c0_139] : memref<4x8x128xf32, #tpu.memory_space<vmem>>, vector<1x8x128xf32>
    %223 = vector.shape_cast %222 : vector<1x8x128xf32> to vector<8x128xf32>
    %224 = arith.mulf %221, %223 : vector<8x128xf32>
    %225 = arith.addf %216, %224 : vector<8x128xf32>
    %cst_140 = arith.constant 2.000000e+00 : f32
    %226 = vector.broadcast %cst_140 : f32 to vector<8x128xf32>
    %227 = arith.subf %226, %215 : vector<8x128xf32>
    %228 = arith.mulf %221, %227 : vector<8x128xf32>
    %cst_141 = arith.constant 0.333333343 : f32
    %229 = vector.broadcast %cst_141 : f32 to vector<8x128xf32>
    %230 = arith.mulf %228, %229 : vector<8x128xf32>
    %c0_142 = arith.constant 0 : index
    %c0_143 = arith.constant 0 : index
    %c0_144 = arith.constant 0 : index
    %231 = vector.load %arg12[%c0_142, %c0_143, %c0_144] : memref<4x8x128xf32, #tpu.memory_space<vmem>>, vector<1x8x128xf32>
    %232 = vector.shape_cast %231 : vector<1x8x128xf32> to vector<8x128xf32>
    %233 = arith.mulf %230, %232 : vector<8x128xf32>
    %234 = arith.addf %225, %233 : vector<8x128xf32>
    %cst_145 = arith.constant 3.000000e+00 : f32
    %235 = vector.broadcast %cst_145 : f32 to vector<8x128xf32>
    %236 = arith.subf %235, %215 : vector<8x128xf32>
    %237 = arith.mulf %230, %236 : vector<8x128xf32>
    %cst_146 = arith.constant 2.500000e-01 : f32
    %238 = vector.broadcast %cst_146 : f32 to vector<8x128xf32>
    %239 = arith.mulf %237, %238 : vector<8x128xf32>
    %c3_147 = arith.constant 3 : index
    %c0_148 = arith.constant 0 : index
    %c0_149 = arith.constant 0 : index
    %240 = vector.load %arg12[%c3_147, %c0_148, %c0_149] : memref<4x8x128xf32, #tpu.memory_space<vmem>>, vector<1x8x128xf32>
    %241 = vector.shape_cast %240 : vector<1x8x128xf32> to vector<8x128xf32>
    %242 = arith.mulf %239, %241 : vector<8x128xf32>
    %243 = arith.addf %234, %242 : vector<8x128xf32>
    %244 = arith.index_cast %201 : i32 to index
    %c0_150 = arith.constant 0 : index
    %245 = vector.load %arg14[%244, %c0_150] : memref<32x128xf32, #tpu.memory_space<vmem>>, vector<8x128xf32>
    %c0_151 = arith.constant 0 : index
    %c0_152 = arith.constant 0 : index
    %246 = vector.load %arg7[%c0_151, %c0_152] : memref<128x128xf32, #tpu.memory_space<vmem>>, vector<128x128xf32>
    %cst_153 = arith.constant dense<0.000000e+00> : vector<8x128xf32>
    %247 = tpu.matmul %243, %246, %cst_153 {dimension_numbers = #tpu.dot_dimension_numbers<[1], [0], [0], [1], [0, 0, 1, 1], [], []>} : vector<8x128xf32>, vector<128x128xf32>, vector<8x128xf32> -> vector<8x128xf32>
    %248 = arith.addf %245, %247 : vector<8x128xf32>
    %249 = math.tanh %248 : vector<8x128xf32>
    %c3_154 = arith.constant 3 : index
    %c0_155 = arith.constant 0 : index
    %c0_156 = arith.constant 0 : index
    %250 = vector.load %arg12[%c3_154, %c0_155, %c0_156] : memref<4x8x128xf32, #tpu.memory_space<vmem>>, vector<1x8x128xf32>
    %251 = vector.shape_cast %250 : vector<1x8x128xf32> to vector<8x128xf32>
    %252 = vector.shape_cast %249 : vector<8x128xf32> to vector<1x8x128xf32>
    tpu.vector_store %arg12[%c3_154, %c0_155, %c0_156], %252 {strides = array<i32>} : memref<4x8x128xf32, #tpu.memory_space<vmem>>, vector<1x8x128xf32>,
    %c0_157 = arith.constant 0 : index
    %c0_158 = arith.constant 0 : index
    %253 = vector.load %arg8[%c0_157, %c0_158] : memref<128x128xf32, #tpu.memory_space<vmem>>, vector<128x128xf32>
    %cst_159 = arith.constant dense<0.000000e+00> : vector<8x128xf32>
    %254 = tpu.matmul %249, %253, %cst_159 {dimension_numbers = #tpu.dot_dimension_numbers<[1], [0], [0], [1], [0, 0, 1, 1], [], []>} : vector<8x128xf32>, vector<128x128xf32>, vector<8x128xf32> -> vector<8x128xf32>
    %255 = arith.addf %254, %18 : vector<8x128xf32>
    %256 = arith.index_cast %201 : i32 to index
    %c0_160 = arith.constant 0 : index
    %257 = vector.load %arg10[%256, %c0_160] : memref<32x128xf32, #tpu.memory_space<vmem>>, vector<8x128xf32>
    tpu.vector_store %arg10[%256, %c0_160], %255 {strides = array<i32>} : memref<32x128xf32, #tpu.memory_space<vmem>>, vector<8x128xf32>,
    %c1_i32_161 = arith.constant 1 : i32
    %c1_i32_162 = arith.constant 1 : i32
    %258 = arith.cmpi eq, %arg0, %c1_i32_162 : i32
    %259 = arith.extui %258 : i1 to i32
    %c0_i32_163 = arith.constant 0 : i32
    %260 = arith.cmpi ne, %259, %c0_i32_163 : i32
    scf.if %260 {
      %c3_164 = arith.constant 3 : index
      %c0_165 = arith.constant 0 : index
      %c0_166 = arith.constant 0 : index
      %261 = vector.load %arg12[%c3_164, %c0_165, %c0_166] : memref<4x8x128xf32, #tpu.memory_space<vmem>>, vector<1x8x128xf32>
      %262 = vector.shape_cast %261 : vector<1x8x128xf32> to vector<8x128xf32>
      %c0_167 = arith.constant 0 : index
      %c0_168 = arith.constant 0 : index
      %c0_169 = arith.constant 0 : index
      %263 = vector.load %arg11[%c0_167, %c0_168, %c0_169] : memref<4x8x128xf32, #tpu.memory_space<vmem>>, vector<1x8x128xf32>
      %264 = vector.shape_cast %263 : vector<1x8x128xf32> to vector<8x128xf32>
      %265 = vector.shape_cast %262 : vector<8x128xf32> to vector<1x8x128xf32>
      tpu.vector_store %arg11[%c0_167, %c0_168, %c0_169], %265 {strides = array<i32>} : memref<4x8x128xf32, #tpu.memory_space<vmem>>, vector<1x8x128xf32>,
      %c2_170 = arith.constant 2 : index
      %c0_171 = arith.constant 0 : index
      %c0_172 = arith.constant 0 : index
      %266 = vector.load %arg12[%c2_170, %c0_171, %c0_172] : memref<4x8x128xf32, #tpu.memory_space<vmem>>, vector<1x8x128xf32>
      %267 = vector.shape_cast %266 : vector<1x8x128xf32> to vector<8x128xf32>
      %c1_173 = arith.constant 1 : index
      %c0_174 = arith.constant 0 : index
      %c0_175 = arith.constant 0 : index
      %268 = vector.load %arg11[%c1_173, %c0_174, %c0_175] : memref<4x8x128xf32, #tpu.memory_space<vmem>>, vector<1x8x128xf32>
      %269 = vector.shape_cast %268 : vector<1x8x128xf32> to vector<8x128xf32>
      %270 = vector.shape_cast %267 : vector<8x128xf32> to vector<1x8x128xf32>
      tpu.vector_store %arg11[%c1_173, %c0_174, %c0_175], %270 {strides = array<i32>} : memref<4x8x128xf32, #tpu.memory_space<vmem>>, vector<1x8x128xf32>,
      %c1_176 = arith.constant 1 : index
      %c0_177 = arith.constant 0 : index
      %c0_178 = arith.constant 0 : index
      %271 = vector.load %arg12[%c1_176, %c0_177, %c0_178] : memref<4x8x128xf32, #tpu.memory_space<vmem>>, vector<1x8x128xf32>
      %272 = vector.shape_cast %271 : vector<1x8x128xf32> to vector<8x128xf32>
      %c2_179 = arith.constant 2 : index
      %c0_180 = arith.constant 0 : index
      %c0_181 = arith.constant 0 : index
      %273 = vector.load %arg11[%c2_179, %c0_180, %c0_181] : memref<4x8x128xf32, #tpu.memory_space<vmem>>, vector<1x8x128xf32>
      %274 = vector.shape_cast %273 : vector<1x8x128xf32> to vector<8x128xf32>
      %275 = vector.shape_cast %272 : vector<8x128xf32> to vector<1x8x128xf32>
      tpu.vector_store %arg11[%c2_179, %c0_180, %c0_181], %275 {strides = array<i32>} : memref<4x8x128xf32, #tpu.memory_space<vmem>>, vector<1x8x128xf32>,
      %c0_182 = arith.constant 0 : index
      %c0_183 = arith.constant 0 : index
      %c0_184 = arith.constant 0 : index
      %276 = vector.load %arg12[%c0_182, %c0_183, %c0_184] : memref<4x8x128xf32, #tpu.memory_space<vmem>>, vector<1x8x128xf32>
      %277 = vector.shape_cast %276 : vector<1x8x128xf32> to vector<8x128xf32>
      %c3_185 = arith.constant 3 : index
      %c0_186 = arith.constant 0 : index
      %c0_187 = arith.constant 0 : index
      %278 = vector.load %arg11[%c3_185, %c0_186, %c0_187] : memref<4x8x128xf32, #tpu.memory_space<vmem>>, vector<1x8x128xf32>
      %279 = vector.shape_cast %278 : vector<1x8x128xf32> to vector<8x128xf32>
      %280 = vector.shape_cast %277 : vector<8x128xf32> to vector<1x8x128xf32>
      tpu.vector_store %arg11[%c3_185, %c0_186, %c0_187], %280 {strides = array<i32>} : memref<4x8x128xf32, #tpu.memory_space<vmem>>, vector<1x8x128xf32>,
    } else {
    }
    return
  }
  func.func @transform_0(%arg0: i32) -> (i32, i32) {
    %c0_i32 = arith.constant 0 : i32
    %c0_i32_0 = arith.constant 0 : i32
    return %arg0, %c0_i32 : i32, i32
  }
  func.func @transform_1(%arg0: i32) -> (i32, i32) {
    %c0_i32 = arith.constant 0 : i32
    %c0_i32_0 = arith.constant 0 : i32
    %c0_i32_1 = arith.constant 0 : i32
    return %c0_i32, %c0_i32_0 : i32, i32
  }
  func.func @transform_2(%arg0: i32) -> (i32, i32) {
    %c0_i32 = arith.constant 0 : i32
    %c0_i32_0 = arith.constant 0 : i32
    %c0_i32_1 = arith.constant 0 : i32
    return %c0_i32, %c0_i32_0 : i32, i32
  }
  func.func @transform_3(%arg0: i32) -> (i32, i32) {
    %c0_i32 = arith.constant 0 : i32
    %c0_i32_0 = arith.constant 0 : i32
    %c0_i32_1 = arith.constant 0 : i32
    return %c0_i32, %c0_i32_0 : i32, i32
  }
  func.func @transform_4(%arg0: i32) -> (i32, i32) {
    %c0_i32 = arith.constant 0 : i32
    %c0_i32_0 = arith.constant 0 : i32
    %c0_i32_1 = arith.constant 0 : i32
    return %c0_i32, %c0_i32_0 : i32, i32
  }
  func.func @transform_5(%arg0: i32) -> (i32, i32) {
    %c0_i32 = arith.constant 0 : i32
    %c0_i32_0 = arith.constant 0 : i32
    %c0_i32_1 = arith.constant 0 : i32
    return %c0_i32, %c0_i32_0 : i32, i32
  }
  func.func @transform_6(%arg0: i32) -> (i32, i32) {
    %c0_i32 = arith.constant 0 : i32
    %c0_i32_0 = arith.constant 0 : i32
    %c0_i32_1 = arith.constant 0 : i32
    return %c0_i32, %c0_i32_0 : i32, i32
  }
  func.func @transform_7(%arg0: i32) -> (i32, i32) {
    %c0_i32 = arith.constant 0 : i32
    %c0_i32_0 = arith.constant 0 : i32
    %c0_i32_1 = arith.constant 0 : i32
    return %c0_i32, %c0_i32_0 : i32, i32
  }
  func.func @transform_8(%arg0: i32) -> (i32, i32) {
    %c0_i32 = arith.constant 0 : i32
    %c0_i32_0 = arith.constant 0 : i32
    %c0_i32_1 = arith.constant 0 : i32
    return %c0_i32, %c0_i32_0 : i32, i32
  }
  func.func @transform_9(%arg0: i32) -> (i32, i32) {
    %c0_i32 = arith.constant 0 : i32
    %c0_i32_0 = arith.constant 0 : i32
    return %arg0, %c0_i32 : i32, i32
  }
  func.func @transform_10(%arg0: i32) -> (i32, i32, i32) {
    %c0_i32 = arith.constant 0 : i32
    %c0_i32_0 = arith.constant 0 : i32
    %c0_i32_1 = arith.constant 0 : i32
    %c0_i32_2 = arith.constant 0 : i32
    return %c0_i32, %c0_i32_0, %c0_i32_1 : i32, i32, i32
  }
}

</mosaic_0001>

<llo_original>
// kernel: mrnn_forward.1
$region0: #{mrnn_forward.1}
  #allocation0 [shape = 'u32[]', space=smem, size = 0x4, offset = 0x4, fixed_abs, tag = 'smem constant byte address 0x4 - core index']
  #allocation1 [shape = 'u32[144,128]{1,0:T(1,128)}', space=vmem, size = 0x12000, scoped, tag = 'internal scratch']
  #allocation2 [shape = 'f32[4,8,128]{2,1,0:T(8,128)}', space=vmem, size = 0x4000, scoped, tag = 'scratch operand']
  #allocation3 [shape = 'f32[32,128]{1,0:T(8,128)}', space=vmem, size = 0x4000, scoped, tag = 'scratch operand']
  #allocation4 [shape = 'f32[32,128]{1,0:T(8,128)}', space=vmem, size = 0x4000, scoped, tag = 'scratch operand']
  %s0 = inlined_call_operand.vmem [shape: f32[64,4], index: 0, kind: input, shape index: {}]
  %s1 = inlined_call_operand.vmem [shape: f32[4,128], index: 1, kind: input, shape index: {}]
  %s2 = inlined_call_operand.vmem [shape: f32[4,128], index: 2, kind: input, shape index: {}]
  %s3 = inlined_call_operand.vmem [shape: f32[1,128], index: 3, kind: input, shape index: {}]
  %s4 = inlined_call_operand.vmem [shape: f32[1,128], index: 4, kind: input, shape index: {}]
  %s5 = inlined_call_operand.vmem [shape: f32[128,128], index: 5, kind: input, shape index: {}]
  %s6 = inlined_call_operand.vmem [shape: f32[128,128], index: 6, kind: input, shape index: {}]
  %s7 = inlined_call_operand.vmem [shape: f32[128,128], index: 7, kind: input, shape index: {}]
  %s8 = inlined_call_operand.vmem [shape: f32[1,128], index: 8, kind: input, shape index: {}]
  %s9 = inlined_call_operand.vmem [shape: f32[64,128], index: 9, kind: output, shape index: {0}]
  %s10 = inlined_call_operand.vmem [shape: f32[4,8,128], index: 10, kind: output, shape index: {1}]
  %11 = xla_tuple %s9, %s10
  %s12 = sld [smem:[#allocation0]]
  $region85: #{mrnn_forward.1} parent=0
    _
  %s14 = ssub.s32 1, %s12
  %s15 = scalar_select 0, %s14, %s12
  loop: start=0, step=1, limit=4
  $region2: #{mrnn_forward.1} parent=0 // loop_pre_header
    _
  $region3: #{mrnn_forward.1} parent=0 // loop_header
    %s17 = sphi 0, %s21
    %p18 = scmp.ge.s32.totalorder %s17, 4
    %s27 = sphi 0, %s29
    %s30 = sphi 0, %s27
    %s31 = sphi 0, %s30
    %s47 = sphi 0, %s31
    %s51 = sphi 0, %s51
    %s53 = sphi 0, %s51
    %s54 = sphi 0, %s53
    %s68 = sphi 0, %s54
    %s72 = sphi 0, %s72
    %s74 = sphi 0, %s72
    %s75 = sphi 0, %s74
    %s89 = sphi 0, %s75
    %s93 = sphi 0, %s93
    %s95 = sphi 0, %s93
    %s96 = sphi 0, %s95
    %s110 = sphi 0, %s96
    %s114 = sphi 0, %s114
    %s116 = sphi 0, %s114
    %s117 = sphi 0, %s116
    %s131 = sphi 0, %s117
    %s135 = sphi 0, %s135
    %s137 = sphi 0, %s135
    %s138 = sphi 0, %s137
    %s152 = sphi 0, %s138
    %s156 = sphi 0, %s156
    %s158 = sphi 0, %s156
    %s159 = sphi 0, %s158
    %s173 = sphi 0, %s159
    %s177 = sphi 0, %s177
    %s179 = sphi 0, %s177
    %s180 = sphi 0, %s179
    %s194 = sphi 0, %s180
    %s198 = sphi 0, %s198
    %s200 = sphi 0, %s198
    %s201 = sphi 0, %s200
    %s215 = sphi 0, %s201
    %s221 = sphi 0, %s223
    %s224 = sphi 0, %s221
    %s225 = sphi 0, %s224
    %s241 = sphi 0, %s225
    %s245 = sphi 0, %s245
    %s247 = sphi 0, %s245
    %s248 = sphi 0, %s247
    %s262 = sphi 0, %s248
  $region4: #{mrnn_forward.1} parent=0 // loop_header_branch
    %20 = sbr.rel (%p18) target = $region8
  $region5: #{mrnn_forward.1} parent=0 // loop_body
    %s22 = ssub.s32 %s17, 1
    %s23 = ssub.s32 %s17, 2
    %s24 = sadd.s32 %s17, 1
    %s25 = ssub.s32 %s17, %s24
    %p26 = scmp.eq.s32.totalorder %s25, 0
    %s28 = sadd.s32 %s27, 1
    %s29 = scalar_select %p26, %s27, %s28
    %p32 = pneg %p26
    %p33 = scmp.eq.s32.totalorder %s17, 1
    %p34 = por %p32, %p33
    %p35 = scmp.ne.s32.totalorder %s27, %s30
    %p36 = scmp.eq.s32.totalorder %s17, 0
    %p37 = por %p35, %p36
    %p38 = scmp.ne.s32.totalorder %s27, %s30
    %p39 = scmp.eq.s32.totalorder %s22, 1
    %p40 = por %p38, %p39
    %p41 = scmp.ne.s32.totalorder %s30, %s31
    %p42 = scmp.eq.s32.totalorder %s22, 0
    %p43 = por %p41, %p42
    %p44 = scmp.ne.s32.totalorder %s30, %s31
    %p45 = scmp.eq.s32.totalorder %s23, 1
    %p46 = por %p44, %p45
    %p48 = scmp.ne.s32.totalorder %s31, %s47
    %p49 = scmp.eq.s32.totalorder %s23, 0
    %p50 = por %p48, %p49
    %s52 = sadd.s32 %s51, 1
    %p55 = scmp.eq.s32.totalorder %s17, 1
    %p56 = scmp.ne.s32.totalorder %s51, %s53
    %p57 = scmp.eq.s32.totalorder %s17, 0
    %p58 = por %p56, %p57
    %p59 = scmp.ne.s32.totalorder %s51, %s53
    %p60 = scmp.eq.s32.totalorder %s22, 1
    %p61 = por %p59, %p60
    %p62 = scmp.ne.s32.totalorder %s53, %s54
    %p63 = scmp.eq.s32.totalorder %s22, 0
    %p64 = por %p62, %p63
    %p65 = scmp.ne.s32.totalorder %s53, %s54
    %p66 = scmp.eq.s32.totalorder %s23, 1
    %p67 = por %p65, %p66
    %p69 = scmp.ne.s32.totalorder %s54, %s68
    %p70 = scmp.eq.s32.totalorder %s23, 0
    %p71 = por %p69, %p70
    %s73 = sadd.s32 %s72, 1
    %p76 = scmp.eq.s32.totalorder %s17, 1
    %p77 = scmp.ne.s32.totalorder %s72, %s74
    %p78 = scmp.eq.s32.totalorder %s17, 0
    %p79 = por %p77, %p78
    %p80 = scmp.ne.s32.totalorder %s72, %s74
    %p81 = scmp.eq.s32.totalorder %s22, 1
    %p82 = por %p80, %p81
    %p83 = scmp.ne.s32.totalorder %s74, %s75
    %p84 = scmp.eq.s32.totalorder %s22, 0
    %p85 = por %p83, %p84
    %p86 = scmp.ne.s32.totalorder %s74, %s75
    %p87 = scmp.eq.s32.totalorder %s23, 1
    %p88 = por %p86, %p87
    %p90 = scmp.ne.s32.totalorder %s75, %s89
    %p91 = scmp.eq.s32.totalorder %s23, 0
    %p92 = por %p90, %p91
    %s94 = sadd.s32 %s93, 1
    %p97 = scmp.eq.s32.totalorder %s17, 1
    %p98 = scmp.ne.s32.totalorder %s93, %s95
    %p99 = scmp.eq.s32.totalorder %s17, 0
    %p100 = por %p98, %p99
    %p101 = scmp.ne.s32.totalorder %s93, %s95
    %p102 = scmp.eq.s32.totalorder %s22, 1
    %p103 = por %p101, %p102
    %p104 = scmp.ne.s32.totalorder %s95, %s96
    %p105 = scmp.eq.s32.totalorder %s22, 0
    %p106 = por %p104, %p105
    %p107 = scmp.ne.s32.totalorder %s95, %s96
    %p108 = scmp.eq.s32.totalorder %s23, 1
    %p109 = por %p107, %p108
    %p111 = scmp.ne.s32.totalorder %s96, %s110
    %p112 = scmp.eq.s32.totalorder %s23, 0
    %p113 = por %p111, %p112
    %s115 = sadd.s32 %s114, 1
    %p118 = scmp.eq.s32.totalorder %s17, 1
    %p119 = scmp.ne.s32.totalorder %s114, %s116
    %p120 = scmp.eq.s32.totalorder %s17, 0
    %p121 = por %p119, %p120
    %p122 = scmp.ne.s32.totalorder %s114, %s116
    %p123 = scmp.eq.s32.totalorder %s22, 1
    %p124 = por %p122, %p123
    %p125 = scmp.ne.s32.totalorder %s116, %s117
    %p126 = scmp.eq.s32.totalorder %s22, 0
    %p127 = por %p125, %p126
    %p128 = scmp.ne.s32.totalorder %s116, %s117
    %p129 = scmp.eq.s32.totalorder %s23, 1
    %p130 = por %p128, %p129
    %p132 = scmp.ne.s32.totalorder %s117, %s131
    %p133 = scmp.eq.s32.totalorder %s23, 0
    %p134 = por %p132, %p133
    %s136 = sadd.s32 %s135, 1
    %p139 = scmp.eq.s32.totalorder %s17, 1
    %p140 = scmp.ne.s32.totalorder %s135, %s137
    %p141 = scmp.eq.s32.totalorder %s17, 0
    %p142 = por %p140, %p141
    %p143 = scmp.ne.s32.totalorder %s135, %s137
    %p144 = scmp.eq.s32.totalorder %s22, 1
    %p145 = por %p143, %p144
    %p146 = scmp.ne.s32.totalorder %s137, %s138
    %p147 = scmp.eq.s32.totalorder %s22, 0
    %p148 = por %p146, %p147
    %p149 = scmp.ne.s32.totalorder %s137, %s138
    %p150 = scmp.eq.s32.totalorder %s23, 1
    %p151 = por %p149, %p150
    %p153 = scmp.ne.s32.totalorder %s138, %s152
    %p154 = scmp.eq.s32.totalorder %s23, 0
    %p155 = por %p153, %p154
    %s157 = sadd.s32 %s156, 1
    %p160 = scmp.eq.s32.totalorder %s17, 1
    %p161 = scmp.ne.s32.totalorder %s156, %s158
    %p162 = scmp.eq.s32.totalorder %s17, 0
    %p163 = por %p161, %p162
    %p164 = scmp.ne.s32.totalorder %s156, %s158
    %p165 = scmp.eq.s32.totalorder %s22, 1
    %p166 = por %p164, %p165
    %p167 = scmp.ne.s32.totalorder %s158, %s159
    %p168 = scmp.eq.s32.totalorder %s22, 0
    %p169 = por %p167, %p168
    %p170 = scmp.ne.s32.totalorder %s158, %s159
    %p171 = scmp.eq.s32.totalorder %s23, 1
    %p172 = por %p170, %p171
    %p174 = scmp.ne.s32.totalorder %s159, %s173
    %p175 = scmp.eq.s32.totalorder %s23, 0
    %p176 = por %p174, %p175
    %s178 = sadd.s32 %s177, 1
    %p181 = scmp.eq.s32.totalorder %s17, 1
    %p182 = scmp.ne.s32.totalorder %s177, %s179
    %p183 = scmp.eq.s32.totalorder %s17, 0
    %p184 = por %p182, %p183
    %p185 = scmp.ne.s32.totalorder %s177, %s179
    %p186 = scmp.eq.s32.totalorder %s22, 1
    %p187 = por %p185, %p186
    %p188 = scmp.ne.s32.totalorder %s179, %s180
    %p189 = scmp.eq.s32.totalorder %s22, 0
    %p190 = por %p188, %p189
    %p191 = scmp.ne.s32.totalorder %s179, %s180
    %p192 = scmp.eq.s32.totalorder %s23, 1
    %p193 = por %p191, %p192
    %p195 = scmp.ne.s32.totalorder %s180, %s194
    %p196 = scmp.eq.s32.totalorder %s23, 0
    %p197 = por %p195, %p196
    %s199 = sadd.s32 %s198, 1
    %p202 = scmp.eq.s32.totalorder %s17, 1
    %p203 = scmp.ne.s32.totalorder %s198, %s200
    %p204 = scmp.eq.s32.totalorder %s17, 0
    %p205 = por %p203, %p204
    %p206 = scmp.ne.s32.totalorder %s198, %s200
    %p207 = scmp.eq.s32.totalorder %s22, 1
    %p208 = por %p206, %p207
    %p209 = scmp.ne.s32.totalorder %s200, %s201
    %p210 = scmp.eq.s32.totalorder %s22, 0
    %p211 = por %p209, %p210
    %p212 = scmp.ne.s32.totalorder %s200, %s201
    %p213 = scmp.eq.s32.totalorder %s23, 1
    %p214 = por %p212, %p213
    %p216 = scmp.ne.s32.totalorder %s201, %s215
    %p217 = scmp.eq.s32.totalorder %s23, 0
    %p218 = por %p216, %p217
    %s219 = ssub.s32 %s17, %s24
    %p220 = scmp.eq.s32.totalorder %s219, 0
    %s222 = sadd.s32 %s221, 1
    %s223 = scalar_select %p220, %s221, %s222
    %p226 = pneg %p220
    %p227 = scmp.eq.s32.totalorder %s17, 1
    %p228 = por %p226, %p227
    %p229 = scmp.ne.s32.totalorder %s221, %s224
    %p230 = scmp.eq.s32.totalorder %s17, 0
    %p231 = por %p229, %p230
    %p232 = scmp.ne.s32.totalorder %s221, %s224
    %p233 = scmp.eq.s32.totalorder %s22, 1
    %p234 = por %p232, %p233
    %p235 = scmp.ne.s32.totalorder %s224, %s225
    %p236 = scmp.eq.s32.totalorder %s22, 0
    %p237 = por %p235, %p236
    %p238 = scmp.ne.s32.totalorder %s224, %s225
    %p239 = scmp.eq.s32.totalorder %s23, 1
    %p240 = por %p238, %p239
    %p242 = scmp.ne.s32.totalorder %s225, %s241
    %p243 = scmp.eq.s32.totalorder %s23, 0
    %p244 = por %p242, %p243
    %s246 = sadd.s32 %s245, 1
    %p249 = scmp.eq.s32.totalorder %s17, 1
    %p250 = scmp.ne.s32.totalorder %s245, %s247
    %p251 = scmp.eq.s32.totalorder %s17, 0
    %p252 = por %p250, %p251
    %p253 = scmp.ne.s32.totalorder %s245, %s247
    %p254 = scmp.eq.s32.totalorder %s22, 1
    %p255 = por %p253, %p254
    %p256 = scmp.ne.s32.totalorder %s247, %s248
    %p257 = scmp.eq.s32.totalorder %s22, 0
    %p258 = por %p256, %p257
    %p259 = scmp.ne.s32.totalorder %s247, %s248
    %p260 = scmp.eq.s32.totalorder %s23, 1
    %p261 = por %p259, %p260
    %p263 = scmp.ne.s32.totalorder %s248, %s262
    %p264 = scmp.eq.s32.totalorder %s23, 0
    %p265 = por %p263, %p264
    %p266 = scmp.le.s32.totalorder 1, %s17
    %p267 = scmp.lt.s32.totalorder %s17, 3
    %p268 = pnand %p266, %p267
    %p269 = pneg %p268
    // Predicated region
    $region9: #{mrnn_forward.1} parent=5 // pred_check
      _
    $region10: #{mrnn_forward.1} parent=5 // pred_check_branch
      %271 = sbr.rel (%p268) target = $region12
    $region11: #{mrnn_forward.1} parent=5 // pred_region
      %s272 = ssub.s32 %s17, 1
      // Predicated region
      $region13: #{mrnn_forward.1} parent=11 // pred_check
        %p273 = pneg %p64
      $region14: #{mrnn_forward.1} parent=11 // pred_check_branch
        %275 = sbr.rel (%p273) target = $region16
      $region15: #{mrnn_forward.1} parent=11 // pred_region
        _
      $region16: #{mrnn_forward.1} parent=11 // pred_fallthru
        _
      // Predicated region
      $region17: #{mrnn_forward.1} parent=11 // pred_check
        %p276 = pneg %p85
      $region18: #{mrnn_forward.1} parent=11 // pred_check_branch
        %278 = sbr.rel (%p276) target = $region20
      $region19: #{mrnn_forward.1} parent=11 // pred_region
        _
      $region20: #{mrnn_forward.1} parent=11 // pred_fallthru
        _
      // Predicated region
      $region21: #{mrnn_forward.1} parent=11 // pred_check
        %p279 = pneg %p106
      $region22: #{mrnn_forward.1} parent=11 // pred_check_branch
        %281 = sbr.rel (%p279) target = $region24
      $region23: #{mrnn_forward.1} parent=11 // pred_region
        _
      $region24: #{mrnn_forward.1} parent=11 // pred_fallthru
        _
      // Predicated region
      $region25: #{mrnn_forward.1} parent=11 // pred_check
        %p282 = pneg %p127
      $region26: #{mrnn_forward.1} parent=11 // pred_check_branch
        %284 = sbr.rel (%p282) target = $region28
      $region27: #{mrnn_forward.1} parent=11 // pred_region
        _
      $region28: #{mrnn_forward.1} parent=11 // pred_fallthru
        _
      // Predicated region
      $region29: #{mrnn_forward.1} parent=11 // pred_check
        %p285 = pneg %p148
      $region30: #{mrnn_forward.1} parent=11 // pred_check_branch
        %287 = sbr.rel (%p285) target = $region32
      $region31: #{mrnn_forward.1} parent=11 // pred_region
        _
      $region32: #{mrnn_forward.1} parent=11 // pred_fallthru
        _
      // Predicated region
      $region33: #{mrnn_forward.1} parent=11 // pred_check
        %p288 = pneg %p169
      $region34: #{mrnn_forward.1} parent=11 // pred_check_branch
        %290 = sbr.rel (%p288) target = $region36
      $region35: #{mrnn_forward.1} parent=11 // pred_region
        _
      $region36: #{mrnn_forward.1} parent=11 // pred_fallthru
        _
      // Predicated region
      $region37: #{mrnn_forward.1} parent=11 // pred_check
        %p291 = pneg %p190
      $region38: #{mrnn_forward.1} parent=11 // pred_check_branch
        %293 = sbr.rel (%p291) target = $region40
      $region39: #{mrnn_forward.1} parent=11 // pred_region
        _
      $region40: #{mrnn_forward.1} parent=11 // pred_fallthru
        _
      // Predicated region
      $region41: #{mrnn_forward.1} parent=11 // pred_check
        %p294 = pneg %p211
      $region42: #{mrnn_forward.1} parent=11 // pred_check_branch
        %296 = sbr.rel (%p294) target = $region44
      $region43: #{mrnn_forward.1} parent=11 // pred_region
        _
      $region44: #{mrnn_forward.1} parent=11 // pred_fallthru
        _
    $region12: #{mrnn_forward.1} parent=5 // pred_fallthru
      _
    %p297 = scmp.lt.s32.totalorder %s17, 2
    // Predicated region
    $region45: #{mrnn_forward.1} parent=5 // pred_check
      %p298 = pneg %p297
    $region46: #{mrnn_forward.1} parent=5 // pred_check_branch
      %300 = sbr.rel (%p298) target = $region48
    $region47: #{mrnn_forward.1} parent=5 // pred_region
      // Predicated region
      $region49: #{mrnn_forward.1} parent=47 // pred_check
        %p301 = pneg %p37
      $region50: #{mrnn_forward.1} parent=47 // pred_check_branch
        %303 = sbr.rel (%p301) target = $region52
      $region51: #{mrnn_forward.1} parent=47 // pred_region
        %s304 = smul.u32 4, %s17
        %p305 = scmp.lt.s32.totalorder %s304, 7
        %s306 = scalar_select %p305, %s304, 7
        %s307 = smul.addr %s306, 8
        %s308 = scalar_lea.vmem %s0, %s307
        %s309 = smul.u32 4, %s17
      $region52: #{mrnn_forward.1} parent=47 // pred_fallthru
        _
    $region48: #{mrnn_forward.1} parent=5 // pred_fallthru
      _
    %p310 = scmp.le.s32.totalorder 1, %s17
    %p311 = scmp.lt.s32.totalorder %s17, 3
    %p312 = pnand %p310, %p311
    %p313 = pneg %p312
    // Predicated region
    $region53: #{mrnn_forward.1} parent=5 // pred_check
      _
    $region54: #{mrnn_forward.1} parent=5 // pred_check_branch
      %315 = sbr.rel (%p312) target = $region56
    $region55: #{mrnn_forward.1} parent=5 // pred_region
      %s316 = ssub.s32 %s17, 1
      %s317 = smul.u32 4, %s22
      %p318 = scmp.lt.s32.totalorder %s317, 7
      %s319 = scalar_select %p318, %s317, 7
      %s320 = smul.addr %s319, 8
      %s321 = scalar_lea.vmem %s0, %s320
      %p322 = pneg %p43
      %p323 = pneg %p40
      %p324 = pneg %p64
      %p325 = pneg %p61
      %p326 = pneg %p85
      %p327 = pneg %p82
      %p328 = pneg %p106
      %p329 = pneg %p103
      %p330 = pneg %p127
      %p331 = pneg %p124
      %p332 = pneg %p148
      %p333 = pneg %p145
      %p334 = pneg %p169
      %p335 = pneg %p166
      %p336 = pneg %p190
      %p337 = pneg %p187
      %p338 = pneg %p211
      %p339 = pneg %p208
      %p340 = pneg %p237
      %p341 = pneg %p234
      %s342 = smul.u32 4, %s22
      %p343 = scmp.lt.s32.totalorder %s342, 7
      %s344 = scalar_select %p343, %s342, 7
      %s345 = smul.addr %s344, 8
      %s346 = scalar_lea.vmem %s9, %s345
      %p347 = pneg %p258
      %p348 = pneg %p255
      %s349 = smul.u32 4, %s22
      %p350 = scmp.lt.s32.totalorder %s349, 7
      %s351 = scalar_select %p350, %s349, 7
      %s352 = smul.addr %s351, 8
      %s353 = scalar_lea.vmem %s0, %s352
      %s354 = smul.u32 4, %s22
      %s355 = smul.u32 4, %s22
      %p356 = scmp.lt.s32.totalorder %s355, 7
      %s357 = scalar_select %p356, %s355, 7
      %s358 = smul.addr %s357, 8
      %s359 = scalar_lea.vmem %s9, %s358
      %s360 = smul.u32 4, %s22
      %p361 = scmp.eq.s32.totalorder %s22, 0
      // Predicated region
      $region57: #{mrnn_forward.1} parent=55 // pred_check
        %p362 = pneg %p361
      $region58: #{mrnn_forward.1} parent=55 // pred_check_branch
        %364 = sbr.rel (%p362) target = $region60
      $region59: #{mrnn_forward.1} parent=55 // pred_region
        %365 = vst [vmem:[#allocation2] sm:$0xff] 0.0
        %366 = vst [vmem:[#allocation2 + $0x8] sm:$0xff] 0.0
        %367 = vst [vmem:[#allocation2 + $0x10] sm:$0xff] 0.0
        %368 = vst [vmem:[#allocation2 + $0x18] sm:$0xff] 0.0
      $region60: #{mrnn_forward.1} parent=55 // pred_fallthru
        _
      %v369 = vld [vmem:[%s353] sm:$0xff]
      %v370 = vld [vmem:[%s353 + $0x8] sm:$0xff]
      %v371 = vld [vmem:[%s353 + $0x10] sm:$0xff]
      %v372 = vld [vmem:[%s353 + $0x18] sm:$0xff]
      %v373 = vld [vmem:[%s1] sm:$0xf]
      %v374 = vld [vmem:[%s3] sm:$0x1]
      %v376 = vlaneseq
      %v377 = vshrl.u32 %v376, 7
      %v378 = vsub.s32 0, %v377
      %v379 = vrot.slane %v374, %v378
      %vm381 = vcmask 31744
      %v383 = vsel %vm381, %v369, 0
      %v386 = vsel %vm381, %v370, 0
      %v389 = vsel %vm381, %v371, 0
      %v392 = vsel %vm381, %v372, 0
      %vm394 = vcmask 1043456
      %v396 = vsel %vm394, %v373, 0
      %398 = vmatprep.subr.mxu0 0.0
      %399 = vmatpush1.msra.mxu0 %v396
      %400 = vmatprep.subr.mxu0 0.0
      %401 = vmatpush1.msra.mxu0 0.0
      %402 = vmatprep.subr.mxu0 0.0
      %403 = vmatpush1.msra.mxu0 0.0
      %404 = vmatprep.subr.mxu0 0.0
      %405 = vmatpush1.msra.mxu0 0.0
      %406 = vmatprep.subr.mxu0 0.0
      %407 = vmatpush1.msra.mxu0 0.0
      %408 = vmatprep.subr.mxu0 0.0
      %409 = vmatpush1.msra.mxu0 0.0
      %410 = vmatprep.subr.mxu0 0.0
      %411 = vmatpush1.msra.mxu0 0.0
      %412 = vmatprep.subr.mxu0 0.0
      %413 = vmatpush1.msra.mxu0 0.0
      %414 = vmatprep.subr.mxu0 0.0
      %415 = vmatpush1.msra.mxu0 0.0
      %416 = vmatprep.subr.mxu0 0.0
      %417 = vmatpush1.msra.mxu0 0.0
      %418 = vmatprep.subr.mxu0 0.0
      %419 = vmatpush1.msra.mxu0 0.0
      %420 = vmatprep.subr.mxu0 0.0
      %421 = vmatpush1.msra.mxu0 0.0
      %422 = vmatprep.subr.mxu0 0.0
      %423 = vmatpush1.msra.mxu0 0.0
      %424 = vmatprep.subr.mxu0 0.0
      %425 = vmatpush1.msra.mxu0 0.0
      %426 = vmatprep.subr.mxu0 0.0
      %427 = vmatpush1.msra.mxu0 0.0
      %428 = vmatprep.subr.mxu0 0.0
      %429 = vmatpush1.msra.mxu0 0.0
      %430 = vmatprep.subr.mxu0 0.0
      %431 = vmatpush1.msra.mxu0 0.0
      %432 = vmatprep.subr.mxu0 0.0
      %433 = vmatpush1.msra.mxu0 0.0
      %434 = vmatprep.subr.mxu0 0.0
      %435 = vmatpush1.msra.mxu0 0.0
      %436 = vmatprep.subr.mxu0 0.0
      %437 = vmatpush1.msra.mxu0 0.0
      %438 = vmatprep.subr.mxu0 0.0
      %439 = vmatpush1.msra.mxu0 0.0
      %440 = vmatprep.subr.mxu0 0.0
      %441 = vmatpush1.msra.mxu0 0.0
      %442 = vmatprep.subr.mxu0 0.0
      %443 = vmatpush1.msra.mxu0 0.0
      %444 = vmatprep.subr.mxu0 0.0
      %445 = vmatpush1.msra.mxu0 0.0
      %446 = vmatprep.subr.mxu0 0.0
      %447 = vmatpush1.msra.mxu0 0.0
      %448 = vmatprep.subr.mxu0 0.0
      %449 = vmatpush1.msra.mxu0 0.0
      %450 = vmatprep.subr.mxu0 0.0
      %451 = vmatpush1.msra.mxu0 0.0
      %452 = vmatprep.subr.mxu0 0.0
      %453 = vmatpush1.msra.mxu0 0.0
      %454 = vmatprep.subr.mxu0 0.0
      %455 = vmatpush1.msra.mxu0 0.0
      %456 = vmatprep.subr.mxu0 0.0
      %457 = vmatpush1.msra.mxu0 0.0
      %458 = vmatprep.subr.mxu0 0.0
      %459 = vmatpush1.msra.mxu0 0.0
      %460 = vmatprep.subr.mxu0 0.0
      %461 = vmatpush1.msra.mxu0 0.0
      %462 = vmatprep.mubr.f32.mxu0 0.0
      %463 = vmatmul.mubr.f32.gmra.mrb[0].mxu0 %v383
      %v464 = vpop.f32.mrb[0].mxu0
      %v465 = vadd.f32 %v379, %v464
      %v466 = vpop.f32.mrb[0].mxu0
      %467 = vmatprep.mubr.f32.mxu0 0.0
      %468 = vmatmul.mubr.f32.gmra.mrb[0].mxu0 %v386
      %v469 = vpop.f32.mrb[0].mxu0
      %v470 = vadd.f32 %v379, %v469
      %v471 = vpop.f32.mrb[0].mxu0
      %472 = vmatprep.mubr.f32.mxu0 0.0
      %473 = vmatmul.mubr.f32.gmra.mrb[0].mxu0 %v389
      %v474 = vpop.f32.mrb[0].mxu0
      %v475 = vadd.f32 %v379, %v474
      %v476 = vpop.f32.mrb[0].mxu0
      %477 = vmatprep.mubr.f32.mxu0 0.0
      %478 = vmatmul.mubr.f32.gmra.mrb[0].mxu0 %v392
      %v479 = vpop.f32.mrb[0].mxu0
      %v480 = vadd.f32 %v379, %v479
      %v481 = vpop.f32.mrb[0].mxu0
      %482 = vdwg.mxu0
      %483 = vst [vmem:[#allocation3] sm:$0xff] %v465
      %484 = vst [vmem:[#allocation3 + $0x8] sm:$0xff] %v470
      %485 = vst [vmem:[#allocation3 + $0x10] sm:$0xff] %v475
      %486 = vst [vmem:[#allocation3 + $0x18] sm:$0xff] %v480
      %v487 = vld [vmem:[%s2] sm:$0xf]
      %v488 = vld [vmem:[%s4] sm:$0x1]
      %v490 = vlaneseq
      %v491 = vshrl.u32 %v490, 7
      %v492 = vsub.s32 0, %v491
      %v493 = vrot.slane %v488, %v492
      %v496 = vsel %vm394, %v487, 0
      %498 = vmatprep.subr.mxu0 0.0
      %499 = vmatpush1.msra.mxu0 %v496
      %500 = vmatprep.subr.mxu0 0.0
      %501 = vmatpush1.msra.mxu0 0.0
      %502 = vmatprep.subr.mxu0 0.0
      %503 = vmatpush1.msra.mxu0 0.0
      %504 = vmatprep.subr.mxu0 0.0
      %505 = vmatpush1.msra.mxu0 0.0
      %506 = vmatprep.subr.mxu0 0.0
      %507 = vmatpush1.msra.mxu0 0.0
      %508 = vmatprep.subr.mxu0 0.0
      %509 = vmatpush1.msra.mxu0 0.0
      %510 = vmatprep.subr.mxu0 0.0
      %511 = vmatpush1.msra.mxu0 0.0
      %512 = vmatprep.subr.mxu0 0.0
      %513 = vmatpush1.msra.mxu0 0.0
      %514 = vmatprep.subr.mxu0 0.0
      %515 = vmatpush1.msra.mxu0 0.0
      %516 = vmatprep.subr.mxu0 0.0
      %517 = vmatpush1.msra.mxu0 0.0
      %518 = vmatprep.subr.mxu0 0.0
      %519 = vmatpush1.msra.mxu0 0.0
      %520 = vmatprep.subr.mxu0 0.0
      %521 = vmatpush1.msra.mxu0 0.0
      %522 = vmatprep.subr.mxu0 0.0
      %523 = vmatpush1.msra.mxu0 0.0
      %524 = vmatprep.subr.mxu0 0.0
      %525 = vmatpush1.msra.mxu0 0.0
      %526 = vmatprep.subr.mxu0 0.0
      %527 = vmatpush1.msra.mxu0 0.0
      %528 = vmatprep.subr.mxu0 0.0
      %529 = vmatpush1.msra.mxu0 0.0
      %530 = vmatprep.subr.mxu0 0.0
      %531 = vmatpush1.msra.mxu0 0.0
      %532 = vmatprep.subr.mxu0 0.0
      %533 = vmatpush1.msra.mxu0 0.0
      %534 = vmatprep.subr.mxu0 0.0
      %535 = vmatpush1.msra.mxu0 0.0
      %536 = vmatprep.subr.mxu0 0.0
      %537 = vmatpush1.msra.mxu0 0.0
      %538 = vmatprep.subr.mxu0 0.0
      %539 = vmatpush1.msra.mxu0 0.0
      %540 = vmatprep.subr.mxu0 0.0
      %541 = vmatpush1.msra.mxu0 0.0
      %542 = vmatprep.subr.mxu0 0.0
      %543 = vmatpush1.msra.mxu0 0.0
      %544 = vmatprep.subr.mxu0 0.0
      %545 = vmatpush1.msra.mxu0 0.0
      %546 = vmatprep.subr.mxu0 0.0
      %547 = vmatpush1.msra.mxu0 0.0
      %548 = vmatprep.subr.mxu0 0.0
      %549 = vmatpush1.msra.mxu0 0.0
      %550 = vmatprep.subr.mxu0 0.0
      %551 = vmatpush1.msra.mxu0 0.0
      %552 = vmatprep.subr.mxu0 0.0
      %553 = vmatpush1.msra.mxu0 0.0
      %554 = vmatprep.subr.mxu0 0.0
      %555 = vmatpush1.msra.mxu0 0.0
      %556 = vmatprep.subr.mxu0 0.0
      %557 = vmatpush1.msra.mxu0 0.0
      %558 = vmatprep.subr.mxu0 0.0
      %559 = vmatpush1.msra.mxu0 0.0
      %560 = vmatprep.subr.mxu0 0.0
      %561 = vmatpush1.msra.mxu0 0.0
      %562 = vmatprep.mubr.f32.mxu0 0.0
      %563 = vmatmul.mubr.f32.gmra.mrb[0].mxu0 %v383
      %v564 = vpop.f32.mrb[0].mxu0
      %v565 = vadd.f32 %v493, %v564
      %v566 = vpop.f32.mrb[0].mxu0
      %567 = vmatprep.mubr.f32.mxu0 0.0
      %568 = vmatmul.mubr.f32.gmra.mrb[0].mxu0 %v386
      %v569 = vpop.f32.mrb[0].mxu0
      %v570 = vadd.f32 %v493, %v569
      %v571 = vpop.f32.mrb[0].mxu0
      %572 = vmatprep.mubr.f32.mxu0 0.0
      %573 = vmatmul.mubr.f32.gmra.mrb[0].mxu0 %v389
      %v574 = vpop.f32.mrb[0].mxu0
      %v575 = vadd.f32 %v493, %v574
      %v576 = vpop.f32.mrb[0].mxu0
      %577 = vmatprep.mubr.f32.mxu0 0.0
      %578 = vmatmul.mubr.f32.gmra.mrb[0].mxu0 %v392
      %v579 = vpop.f32.mrb[0].mxu0
      %v580 = vadd.f32 %v493, %v579
      %v581 = vpop.f32.mrb[0].mxu0
      %582 = vdwg.mxu0
      %583 = vst [vmem:[#allocation4] sm:$0xff] %v565
      %584 = vst [vmem:[#allocation4 + $0x8] sm:$0xff] %v570
      %585 = vst [vmem:[#allocation4 + $0x10] sm:$0xff] %v575
      %586 = vst [vmem:[#allocation4 + $0x18] sm:$0xff] %v580
      %v587 = vld [vmem:[%s8] sm:$0x1]
      %v589 = vlaneseq
      %v590 = vshrl.u32 %v589, 7
      %v591 = vsub.s32 0, %v590
      %v592 = vrot.slane %v587, %v591
      %s594 = scalar_lea.vmem [#allocation2], 24
      %v595 = vld [vmem:[%s594] sm:$0xff]
      %v596 = vld [vmem:[#allocation3] sm:$0xff]
      %v597 = vld [vmem:[%s5] sm:$0xff]
      %v598 = vld [vmem:[%s5 + $0x8] sm:$0xff]
      %v599 = vld [vmem:[%s5 + $0x10] sm:$0xff]
      %v600 = vld [vmem:[%s5 + $0x18] sm:$0xff]
      %v601 = vld [vmem:[%s5 + $0x20] sm:$0xff]
      %v602 = vld [vmem:[%s5 + $0x28] sm:$0xff]
      %v603 = vld [vmem:[%s5 + $0x30] sm:$0xff]
      %v604 = vld [vmem:[%s5 + $0x38] sm:$0xff]
      %v605 = vld [vmem:[%s5 + $0x40] sm:$0xff]
      %v606 = vld [vmem:[%s5 + $0x48] sm:$0xff]
      %v607 = vld [vmem:[%s5 + $0x50] sm:$0xff]
      %v608 = vld [vmem:[%s5 + $0x58] sm:$0xff]
      %v609 = vld [vmem:[%s5 + $0x60] sm:$0xff]
      %v610 = vld [vmem:[%s5 + $0x68] sm:$0xff]
      %v611 = vld [vmem:[%s5 + $0x70] sm:$0xff]
      %v612 = vld [vmem:[%s5 + $0x78] sm:$0xff]
      %613 = vmatprep.subr.mxu0 0.0
      %614 = vmatpush1.msra.mxu0 %v597
      %615 = vmatprep.subr.mxu0 0.0
      %616 = vmatpush1.msra.mxu0 %v598
      %617 = vmatprep.subr.mxu0 0.0
      %618 = vmatpush1.msra.mxu0 %v599
      %619 = vmatprep.subr.mxu0 0.0
      %620 = vmatpush1.msra.mxu0 %v600
      %621 = vmatprep.subr.mxu0 0.0
      %622 = vmatpush1.msra.mxu0 %v601
      %623 = vmatprep.subr.mxu0 0.0
      %624 = vmatpush1.msra.mxu0 %v602
      %625 = vmatprep.subr.mxu0 0.0
      %626 = vmatpush1.msra.mxu0 %v603
      %627 = vmatprep.subr.mxu0 0.0
      %628 = vmatpush1.msra.mxu0 %v604
      %629 = vmatprep.subr.mxu0 0.0
      %630 = vmatpush1.msra.mxu0 %v605
      %631 = vmatprep.subr.mxu0 0.0
      %632 = vmatpush1.msra.mxu0 %v606
      %633 = vmatprep.subr.mxu0 0.0
      %634 = vmatpush1.msra.mxu0 %v607
      %635 = vmatprep.subr.mxu0 0.0
      %636 = vmatpush1.msra.mxu0 %v608
      %637 = vmatprep.subr.mxu0 0.0
      %638 = vmatpush1.msra.mxu0 %v609
      %639 = vmatprep.subr.mxu0 0.0
      %640 = vmatpush1.msra.mxu0 %v610
      %641 = vmatprep.subr.mxu0 0.0
      %642 = vmatpush1.msra.mxu0 %v611
      %643 = vmatprep.subr.mxu0 0.0
      %644 = vmatpush1.msra.mxu0 %v612
      %645 = vmatprep.subr.mxu0 0.0
      %646 = vmatpush1.msra.mxu0 0.0
      %647 = vmatprep.subr.mxu0 0.0
      %648 = vmatpush1.msra.mxu0 0.0
      %649 = vmatprep.subr.mxu0 0.0
      %650 = vmatpush1.msra.mxu0 0.0
      %651 = vmatprep.subr.mxu0 0.0
      %652 = vmatpush1.msra.mxu0 0.0
      %653 = vmatprep.subr.mxu0 0.0
      %654 = vmatpush1.msra.mxu0 0.0
      %655 = vmatprep.subr.mxu0 0.0
      %656 = vmatpush1.msra.mxu0 0.0
      %657 = vmatprep.subr.mxu0 0.0
      %658 = vmatpush1.msra.mxu0 0.0
      %659 = vmatprep.subr.mxu0 0.0
      %660 = vmatpush1.msra.mxu0 0.0
      %661 = vmatprep.subr.mxu0 0.0
      %662 = vmatpush1.msra.mxu0 0.0
      %663 = vmatprep.subr.mxu0 0.0
      %664 = vmatpush1.msra.mxu0 0.0
      %665 = vmatprep.subr.mxu0 0.0
      %666 = vmatpush1.msra.mxu0 0.0
      %667 = vmatprep.subr.mxu0 0.0
      %668 = vmatpush1.msra.mxu0 0.0
      %669 = vmatprep.subr.mxu0 0.0
      %670 = vmatpush1.msra.mxu0 0.0
      %671 = vmatprep.subr.mxu0 0.0
      %672 = vmatpush1.msra.mxu0 0.0
      %673 = vmatprep.subr.mxu0 0.0
      %674 = vmatpush1.msra.mxu0 0.0
      %675 = vmatprep.subr.mxu0 0.0
      %676 = vmatpush1.msra.mxu0 0.0
      %677 = vmatprep.mubr.f32.mxu0 0.0
      %678 = vmatmul.mubr.f32.gmra.mrb[0].mxu0 %v595
      %v679 = vpop.f32.mrb[0].mxu0
      %v680 = vadd.f32 0.0, %v679
      %v681 = vpop.f32.mrb[0].mxu0
      %682 = vdwg.mxu0
      %v683 = vadd.f32 %v596, %v680
      %v684 = vxor.u32 %v683, 2147483648
      %v685 = vmul.f32 %v684, 1.442695
      %v686 = vpow.pop %v685
      %v687 = vadd.f32 %v686, 1.0
      %v688 = vrcp.pop %v687
      %v689 = vmul.f32 1.0, %v688
      %v690 = vmul.f32 %v689, 0.5
      %v691 = vmul.f32 %v690, %v595
      %v692 = vsub.f32 1.0, %v690
      %v693 = vmul.f32 %v690, %v692
      %v694 = vmul.f32 %v693, 0.5
      %s695 = scalar_lea.vmem [#allocation2], 16
      %v696 = vld [vmem:[%s695] sm:$0xff]
      %v697 = vmul.f32 %v694, %v696
      %v698 = vadd.f32 %v691, %v697
      %v699 = vsub.f32 2.0, %v690
      %v700 = vmul.f32 %v694, %v699
      %v701 = vmul.f32 %v700, 0.33333334
      %s702 = scalar_lea.vmem [#allocation2], 8
      %v703 = vld [vmem:[%s702] sm:$0xff]
      %v704 = vmul.f32 %v701, %v703
      %v705 = vadd.f32 %v698, %v704
      %v706 = vsub.f32 3.0, %v690
      %v707 = vmul.f32 %v701, %v706
      %v708 = vmul.f32 %v707, 0.25
      %v709 = vld [vmem:[#allocation2] sm:$0xff]
      %v710 = vmul.f32 %v708, %v709
      %v711 = vadd.f32 %v705, %v710
      %v712 = vld [vmem:[#allocation4] sm:$0xff]
      %v713 = vld [vmem:[%s6] sm:$0xff]
      %v714 = vld [vmem:[%s6 + $0x8] sm:$0xff]
      %v715 = vld [vmem:[%s6 + $0x10] sm:$0xff]
      %v716 = vld [vmem:[%s6 + $0x18] sm:$0xff]
      %v717 = vld [vmem:[%s6 + $0x20] sm:$0xff]
      %v718 = vld [vmem:[%s6 + $0x28] sm:$0xff]
      %v719 = vld [vmem:[%s6 + $0x30] sm:$0xff]
      %v720 = vld [vmem:[%s6 + $0x38] sm:$0xff]
      %v721 = vld [vmem:[%s6 + $0x40] sm:$0xff]
      %v722 = vld [vmem:[%s6 + $0x48] sm:$0xff]
      %v723 = vld [vmem:[%s6 + $0x50] sm:$0xff]
      %v724 = vld [vmem:[%s6 + $0x58] sm:$0xff]
      %v725 = vld [vmem:[%s6 + $0x60] sm:$0xff]
      %v726 = vld [vmem:[%s6 + $0x68] sm:$0xff]
      %v727 = vld [vmem:[%s6 + $0x70] sm:$0xff]
      %v728 = vld [vmem:[%s6 + $0x78] sm:$0xff]
      %729 = vmatprep.subr.mxu0 0.0
      %730 = vmatpush1.msra.mxu0 %v713
      %731 = vmatprep.subr.mxu0 0.0
      %732 = vmatpush1.msra.mxu0 %v714
      %733 = vmatprep.subr.mxu0 0.0
      %734 = vmatpush1.msra.mxu0 %v715
      %735 = vmatprep.subr.mxu0 0.0
      %736 = vmatpush1.msra.mxu0 %v716
      %737 = vmatprep.subr.mxu0 0.0
      %738 = vmatpush1.msra.mxu0 %v717
      %739 = vmatprep.subr.mxu0 0.0
      %740 = vmatpush1.msra.mxu0 %v718
      %741 = vmatprep.subr.mxu0 0.0
      %742 = vmatpush1.msra.mxu0 %v719
      %743 = vmatprep.subr.mxu0 0.0
      %744 = vmatpush1.msra.mxu0 %v720
      %745 = vmatprep.subr.mxu0 0.0
      %746 = vmatpush1.msra.mxu0 %v721
      %747 = vmatprep.subr.mxu0 0.0
      %748 = vmatpush1.msra.mxu0 %v722
      %749 = vmatprep.subr.mxu0 0.0
      %750 = vmatpush1.msra.mxu0 %v723
      %751 = vmatprep.subr.mxu0 0.0
      %752 = vmatpush1.msra.mxu0 %v724
      %753 = vmatprep.subr.mxu0 0.0
      %754 = vmatpush1.msra.mxu0 %v725
      %755 = vmatprep.subr.mxu0 0.0
      %756 = vmatpush1.msra.mxu0 %v726
      %757 = vmatprep.subr.mxu0 0.0
      %758 = vmatpush1.msra.mxu0 %v727
      %759 = vmatprep.subr.mxu0 0.0
      %760 = vmatpush1.msra.mxu0 %v728
      %761 = vmatprep.subr.mxu0 0.0
      %762 = vmatpush1.msra.mxu0 0.0
      %763 = vmatprep.subr.mxu0 0.0
      %764 = vmatpush1.msra.mxu0 0.0
      %765 = vmatprep.subr.mxu0 0.0
      %766 = vmatpush1.msra.mxu0 0.0
      %767 = vmatprep.subr.mxu0 0.0
      %768 = vmatpush1.msra.mxu0 0.0
      %769 = vmatprep.subr.mxu0 0.0
      %770 = vmatpush1.msra.mxu0 0.0
      %771 = vmatprep.subr.mxu0 0.0
      %772 = vmatpush1.msra.mxu0 0.0
      %773 = vmatprep.subr.mxu0 0.0
      %774 = vmatpush1.msra.mxu0 0.0
      %775 = vmatprep.subr.mxu0 0.0
      %776 = vmatpush1.msra.mxu0 0.0
      %777 = vmatprep.subr.mxu0 0.0
      %778 = vmatpush1.msra.mxu0 0.0
      %779 = vmatprep.subr.mxu0 0.0
      %780 = vmatpush1.msra.mxu0 0.0
      %781 = vmatprep.subr.mxu0 0.0
      %782 = vmatpush1.msra.mxu0 0.0
      %783 = vmatprep.subr.mxu0 0.0
      %784 = vmatpush1.msra.mxu0 0.0
      %785 = vmatprep.subr.mxu0 0.0
      %786 = vmatpush1.msra.mxu0 0.0
      %787 = vmatprep.subr.mxu0 0.0
      %788 = vmatpush1.msra.mxu0 0.0
      %789 = vmatprep.subr.mxu0 0.0
      %790 = vmatpush1.msra.mxu0 0.0
      %791 = vmatprep.subr.mxu0 0.0
      %792 = vmatpush1.msra.mxu0 0.0
      %793 = vmatprep.mubr.f32.mxu0 0.0
      %794 = vmatmul.mubr.f32.gmra.mrb[0].mxu0 %v711
      %v795 = vpop.f32.mrb[0].mxu0
      %v796 = vadd.f32 0.0, %v795
      %v797 = vpop.f32.mrb[0].mxu0
      %798 = vdwg.mxu0
      %v799 = vadd.f32 %v712, %v796
      %v800 = vtanh.pop %v799
      %801 = vst [vmem:[#allocation2] sm:$0xff] %v800
      %v802 = vld [vmem:[%s7] sm:$0xff]
      %v803 = vld [vmem:[%s7 + $0x8] sm:$0xff]
      %v804 = vld [vmem:[%s7 + $0x10] sm:$0xff]
      %v805 = vld [vmem:[%s7 + $0x18] sm:$0xff]
      %v806 = vld [vmem:[%s7 + $0x20] sm:$0xff]
      %v807 = vld [vmem:[%s7 + $0x28] sm:$0xff]
      %v808 = vld [vmem:[%s7 + $0x30] sm:$0xff]
      %v809 = vld [vmem:[%s7 + $0x38] sm:$0xff]
      %v810 = vld [vmem:[%s7 + $0x40] sm:$0xff]
      %v811 = vld [vmem:[%s7 + $0x48] sm:$0xff]
      %v812 = vld [vmem:[%s7 + $0x50] sm:$0xff]
      %v813 = vld [vmem:[%s7 + $0x58] sm:$0xff]
      %v814 = vld [vmem:[%s7 + $0x60] sm:$0xff]
      %v815 = vld [vmem:[%s7 + $0x68] sm:$0xff]
      %v816 = vld [vmem:[%s7 + $0x70] sm:$0xff]
      %v817 = vld [vmem:[%s7 + $0x78] sm:$0xff]
      %818 = vmatprep.subr.mxu0 0.0
      %819 = vmatpush1.msra.mxu0 %v802
      %820 = vmatprep.subr.mxu0 0.0
      %821 = vmatpush1.msra.mxu0 %v803
      %822 = vmatprep.subr.mxu0 0.0
      %823 = vmatpush1.msra.mxu0 %v804
      %824 = vmatprep.subr.mxu0 0.0
      %825 = vmatpush1.msra.mxu0 %v805
      %826 = vmatprep.subr.mxu0 0.0
      %827 = vmatpush1.msra.mxu0 %v806
      %828 = vmatprep.subr.mxu0 0.0
      %829 = vmatpush1.msra.mxu0 %v807
      %830 = vmatprep.subr.mxu0 0.0
      %831 = vmatpush1.msra.mxu0 %v808
      %832 = vmatprep.subr.mxu0 0.0
      %833 = vmatpush1.msra.mxu0 %v809
      %834 = vmatprep.subr.mxu0 0.0
      %835 = vmatpush1.msra.mxu0 %v810
      %836 = vmatprep.subr.mxu0 0.0
      %837 = vmatpush1.msra.mxu0 %v811
      %838 = vmatprep.subr.mxu0 0.0
      %839 = vmatpush1.msra.mxu0 %v812
      %840 = vmatprep.subr.mxu0 0.0
      %841 = vmatpush1.msra.mxu0 %v813
      %842 = vmatprep.subr.mxu0 0.0
      %843 = vmatpush1.msra.mxu0 %v814
      %844 = vmatprep.subr.mxu0 0.0
      %845 = vmatpush1.msra.mxu0 %v815
      %846 = vmatprep.subr.mxu0 0.0
      %847 = vmatpush1.msra.mxu0 %v816
      %848 = vmatprep.subr.mxu0 0.0
      %849 = vmatpush1.msra.mxu0 %v817
      %850 = vmatprep.subr.mxu0 0.0
      %851 = vmatpush1.msra.mxu0 0.0
      %852 = vmatprep.subr.mxu0 0.0
      %853 = vmatpush1.msra.mxu0 0.0
      %854 = vmatprep.subr.mxu0 0.0
      %855 = vmatpush1.msra.mxu0 0.0
      %856 = vmatprep.subr.mxu0 0.0
      %857 = vmatpush1.msra.mxu0 0.0
      %858 = vmatprep.subr.mxu0 0.0
      %859 = vmatpush1.msra.mxu0 0.0
      %860 = vmatprep.subr.mxu0 0.0
      %861 = vmatpush1.msra.mxu0 0.0
      %862 = vmatprep.subr.mxu0 0.0
      %863 = vmatpush1.msra.mxu0 0.0
      %864 = vmatprep.subr.mxu0 0.0
      %865 = vmatpush1.msra.mxu0 0.0
      %866 = vmatprep.subr.mxu0 0.0
      %867 = vmatpush1.msra.mxu0 0.0
      %868 = vmatprep.subr.mxu0 0.0
      %869 = vmatpush1.msra.mxu0 0.0
      %870 = vmatprep.subr.mxu0 0.0
      %871 = vmatpush1.msra.mxu0 0.0
      %872 = vmatprep.subr.mxu0 0.0
      %873 = vmatpush1.msra.mxu0 0.0
      %874 = vmatprep.subr.mxu0 0.0
      %875 = vmatpush1.msra.mxu0 0.0
      %876 = vmatprep.subr.mxu0 0.0
      %877 = vmatpush1.msra.mxu0 0.0
      %878 = vmatprep.subr.mxu0 0.0
      %879 = vmatpush1.msra.mxu0 0.0
      %880 = vmatprep.subr.mxu0 0.0
      %881 = vmatpush1.msra.mxu0 0.0
      %882 = vmatprep.mubr.f32.mxu0 0.0
      %883 = vmatmul.mubr.f32.gmra.mrb[0].mxu0 %v800
      %v884 = vpop.f32.mrb[0].mxu0
      %v885 = vadd.f32 %v592, %v884
      %v886 = vpop.f32.mrb[0].mxu0
      %887 = vdwg.mxu0
      %888 = vst [vmem:[%s359] sm:$0xff] %v885
      %v889 = vld [vmem:[#allocation2] sm:$0xff]
      %s890 = scalar_lea.vmem [#allocation3], 8
      %v891 = vld [vmem:[%s890] sm:$0xff]
      %v892 = vld [vmem:[%s5] sm:$0xff]
      %v893 = vld [vmem:[%s5 + $0x8] sm:$0xff]
      %v894 = vld [vmem:[%s5 + $0x10] sm:$0xff]
      %v895 = vld [vmem:[%s5 + $0x18] sm:$0xff]
      %v896 = vld [vmem:[%s5 + $0x20] sm:$0xff]
      %v897 = vld [vmem:[%s5 + $0x28] sm:$0xff]
      %v898 = vld [vmem:[%s5 + $0x30] sm:$0xff]
      %v899 = vld [vmem:[%s5 + $0x38] sm:$0xff]
      %v900 = vld [vmem:[%s5 + $0x40] sm:$0xff]
      %v901 = vld [vmem:[%s5 + $0x48] sm:$0xff]
      %v902 = vld [vmem:[%s5 + $0x50] sm:$0xff]
      %v903 = vld [vmem:[%s5 + $0x58] sm:$0xff]
      %v904 = vld [vmem:[%s5 + $0x60] sm:$0xff]
      %v905 = vld [vmem:[%s5 + $0x68] sm:$0xff]
      %v906 = vld [vmem:[%s5 + $0x70] sm:$0xff]
      %v907 = vld [vmem:[%s5 + $0x78] sm:$0xff]
      %908 = vmatprep.subr.mxu0 0.0
      %909 = vmatpush1.msra.mxu0 %v892
      %910 = vmatprep.subr.mxu0 0.0
      %911 = vmatpush1.msra.mxu0 %v893
      %912 = vmatprep.subr.mxu0 0.0
      %913 = vmatpush1.msra.mxu0 %v894
      %914 = vmatprep.subr.mxu0 0.0
      %915 = vmatpush1.msra.mxu0 %v895
      %916 = vmatprep.subr.mxu0 0.0
      %917 = vmatpush1.msra.mxu0 %v896
      %918 = vmatprep.subr.mxu0 0.0
      %919 = vmatpush1.msra.mxu0 %v897
      %920 = vmatprep.subr.mxu0 0.0
      %921 = vmatpush1.msra.mxu0 %v898
      %922 = vmatprep.subr.mxu0 0.0
      %923 = vmatpush1.msra.mxu0 %v899
      %924 = vmatprep.subr.mxu0 0.0
      %925 = vmatpush1.msra.mxu0 %v900
      %926 = vmatprep.subr.mxu0 0.0
      %927 = vmatpush1.msra.mxu0 %v901
      %928 = vmatprep.subr.mxu0 0.0
      %929 = vmatpush1.msra.mxu0 %v902
      %930 = vmatprep.subr.mxu0 0.0
      %931 = vmatpush1.msra.mxu0 %v903
      %932 = vmatprep.subr.mxu0 0.0
      %933 = vmatpush1.msra.mxu0 %v904
      %934 = vmatprep.subr.mxu0 0.0
      %935 = vmatpush1.msra.mxu0 %v905
      %936 = vmatprep.subr.mxu0 0.0
      %937 = vmatpush1.msra.mxu0 %v906
      %938 = vmatprep.subr.mxu0 0.0
      %939 = vmatpush1.msra.mxu0 %v907
      %940 = vmatprep.subr.mxu0 0.0
      %941 = vmatpush1.msra.mxu0 0.0
      %942 = vmatprep.subr.mxu0 0.0
      %943 = vmatpush1.msra.mxu0 0.0
      %944 = vmatprep.subr.mxu0 0.0
      %945 = vmatpush1.msra.mxu0 0.0
      %946 = vmatprep.subr.mxu0 0.0
      %947 = vmatpush1.msra.mxu0 0.0
      %948 = vmatprep.subr.mxu0 0.0
      %949 = vmatpush1.msra.mxu0 0.0
      %950 = vmatprep.subr.mxu0 0.0
      %951 = vmatpush1.msra.mxu0 0.0
      %952 = vmatprep.subr.mxu0 0.0
      %953 = vmatpush1.msra.mxu0 0.0
      %954 = vmatprep.subr.mxu0 0.0
      %955 = vmatpush1.msra.mxu0 0.0
      %956 = vmatprep.subr.mxu0 0.0
      %957 = vmatpush1.msra.mxu0 0.0
      %958 = vmatprep.subr.mxu0 0.0
      %959 = vmatpush1.msra.mxu0 0.0
      %960 = vmatprep.subr.mxu0 0.0
      %961 = vmatpush1.msra.mxu0 0.0
      %962 = vmatprep.subr.mxu0 0.0
      %963 = vmatpush1.msra.mxu0 0.0
      %964 = vmatprep.subr.mxu0 0.0
      %965 = vmatpush1.msra.mxu0 0.0
      %966 = vmatprep.subr.mxu0 0.0
      %967 = vmatpush1.msra.mxu0 0.0
      %968 = vmatprep.subr.mxu0 0.0
      %969 = vmatpush1.msra.mxu0 0.0
      %970 = vmatprep.subr.mxu0 0.0
      %971 = vmatpush1.msra.mxu0 0.0
      %972 = vmatprep.mubr.f32.mxu0 0.0
      %973 = vmatmul.mubr.f32.gmra.mrb[0].mxu0 %v889
      %v974 = vpop.f32.mrb[0].mxu0
      %v975 = vadd.f32 0.0, %v974
      %v976 = vpop.f32.mrb[0].mxu0
      %977 = vdwg.mxu0
      %v978 = vadd.f32 %v891, %v975
      %v979 = vxor.u32 %v978, 2147483648
      %v980 = vmul.f32 %v979, 1.442695
      %v981 = vpow.pop %v980
      %v982 = vadd.f32 %v981, 1.0
      %v983 = vrcp.pop %v982
      %v984 = vmul.f32 1.0, %v983
      %v985 = vmul.f32 %v984, 0.5
      %v986 = vmul.f32 %v985, %v889
      %v987 = vsub.f32 1.0, %v985
      %v988 = vmul.f32 %v985, %v987
      %v989 = vmul.f32 %v988, 0.5
      %v990 = vld [vmem:[%s594] sm:$0xff]
      %v991 = vmul.f32 %v989, %v990
      %v992 = vadd.f32 %v986, %v991
      %v993 = vsub.f32 2.0, %v985
      %v994 = vmul.f32 %v989, %v993
      %v995 = vmul.f32 %v994, 0.33333334
      %v996 = vld [vmem:[%s695] sm:$0xff]
      %v997 = vmul.f32 %v995, %v996
      %v998 = vadd.f32 %v992, %v997
      %v999 = vsub.f32 3.0, %v985
      %v1000 = vmul.f32 %v995, %v999
      %v1001 = vmul.f32 %v1000, 0.25
      %v1002 = vld [vmem:[%s702] sm:$0xff]
      %v1003 = vmul.f32 %v1001, %v1002
      %v1004 = vadd.f32 %v998, %v1003
      %s1005 = scalar_lea.vmem [#allocation4], 8
      %v1006 = vld [vmem:[%s1005] sm:$0xff]
      %v1007 = vld [vmem:[%s6] sm:$0xff]
      %v1008 = vld [vmem:[%s6 + $0x8] sm:$0xff]
      %v1009 = vld [vmem:[%s6 + $0x10] sm:$0xff]
      %v1010 = vld [vmem:[%s6 + $0x18] sm:$0xff]
      %v1011 = vld [vmem:[%s6 + $0x20] sm:$0xff]
      %v1012 = vld [vmem:[%s6 + $0x28] sm:$0xff]
      %v1013 = vld [vmem:[%s6 + $0x30] sm:$0xff]
      %v1014 = vld [vmem:[%s6 + $0x38] sm:$0xff]
      %v1015 = vld [vmem:[%s6 + $0x40] sm:$0xff]
      %v1016 = vld [vmem:[%s6 + $0x48] sm:$0xff]
      %v1017 = vld [vmem:[%s6 + $0x50] sm:$0xff]
      %v1018 = vld [vmem:[%s6 + $0x58] sm:$0xff]
      %v1019 = vld [vmem:[%s6 + $0x60] sm:$0xff]
      %v1020 = vld [vmem:[%s6 + $0x68] sm:$0xff]
      %v1021 = vld [vmem:[%s6 + $0x70] sm:$0xff]
      %v1022 = vld [vmem:[%s6 + $0x78] sm:$0xff]
      %1023 = vmatprep.subr.mxu0 0.0
      %1024 = vmatpush1.msra.mxu0 %v1007
      %1025 = vmatprep.subr.mxu0 0.0
      %1026 = vmatpush1.msra.mxu0 %v1008
      %1027 = vmatprep.subr.mxu0 0.0
      %1028 = vmatpush1.msra.mxu0 %v1009
      %1029 = vmatprep.subr.mxu0 0.0
      %1030 = vmatpush1.msra.mxu0 %v1010
      %1031 = vmatprep.subr.mxu0 0.0
      %1032 = vmatpush1.msra.mxu0 %v1011
      %1033 = vmatprep.subr.mxu0 0.0
      %1034 = vmatpush1.msra.mxu0 %v1012
      %1035 = vmatprep.subr.mxu0 0.0
      %1036 = vmatpush1.msra.mxu0 %v1013
      %1037 = vmatprep.subr.mxu0 0.0
      %1038 = vmatpush1.msra.mxu0 %v1014
      %1039 = vmatprep.subr.mxu0 0.0
      %1040 = vmatpush1.msra.mxu0 %v1015
      %1041 = vmatprep.subr.mxu0 0.0
      %1042 = vmatpush1.msra.mxu0 %v1016
      %1043 = vmatprep.subr.mxu0 0.0
      %1044 = vmatpush1.msra.mxu0 %v1017
      %1045 = vmatprep.subr.mxu0 0.0
      %1046 = vmatpush1.msra.mxu0 %v1018
      %1047 = vmatprep.subr.mxu0 0.0
      %1048 = vmatpush1.msra.mxu0 %v1019
      %1049 = vmatprep.subr.mxu0 0.0
      %1050 = vmatpush1.msra.mxu0 %v1020
      %1051 = vmatprep.subr.mxu0 0.0
      %1052 = vmatpush1.msra.mxu0 %v1021
      %1053 = vmatprep.subr.mxu0 0.0
      %1054 = vmatpush1.msra.mxu0 %v1022
      %1055 = vmatprep.subr.mxu0 0.0
      %1056 = vmatpush1.msra.mxu0 0.0
      %1057 = vmatprep.subr.mxu0 0.0
      %1058 = vmatpush1.msra.mxu0 0.0
      %1059 = vmatprep.subr.mxu0 0.0
      %1060 = vmatpush1.msra.mxu0 0.0
      %1061 = vmatprep.subr.mxu0 0.0
      %1062 = vmatpush1.msra.mxu0 0.0
      %1063 = vmatprep.subr.mxu0 0.0
      %1064 = vmatpush1.msra.mxu0 0.0
      %1065 = vmatprep.subr.mxu0 0.0
      %1066 = vmatpush1.msra.mxu0 0.0
      %1067 = vmatprep.subr.mxu0 0.0
      %1068 = vmatpush1.msra.mxu0 0.0
      %1069 = vmatprep.subr.mxu0 0.0
      %1070 = vmatpush1.msra.mxu0 0.0
      %1071 = vmatprep.subr.mxu0 0.0
      %1072 = vmatpush1.msra.mxu0 0.0
      %1073 = vmatprep.subr.mxu0 0.0
      %1074 = vmatpush1.msra.mxu0 0.0
      %1075 = vmatprep.subr.mxu0 0.0
      %1076 = vmatpush1.msra.mxu0 0.0
      %1077 = vmatprep.subr.mxu0 0.0
      %1078 = vmatpush1.msra.mxu0 0.0
      %1079 = vmatprep.subr.mxu0 0.0
      %1080 = vmatpush1.msra.mxu0 0.0
      %1081 = vmatprep.subr.mxu0 0.0
      %1082 = vmatpush1.msra.mxu0 0.0
      %1083 = vmatprep.subr.mxu0 0.0
      %1084 = vmatpush1.msra.mxu0 0.0
      %1085 = vmatprep.subr.mxu0 0.0
      %1086 = vmatpush1.msra.mxu0 0.0
      %1087 = vmatprep.mubr.f32.mxu0 0.0
      %1088 = vmatmul.mubr.f32.gmra.mrb[0].mxu0 %v1004
      %v1089 = vpop.f32.mrb[0].mxu0
      %v1090 = vadd.f32 0.0, %v1089
      %v1091 = vpop.f32.mrb[0].mxu0
      %1092 = vdwg.mxu0
      %v1093 = vadd.f32 %v1006, %v1090
      %v1094 = vtanh.pop %v1093
      %1095 = vst [vmem:[%s702] sm:$0xff] %v1094
      %v1096 = vld [vmem:[%s7] sm:$0xff]
      %v1097 = vld [vmem:[%s7 + $0x8] sm:$0xff]
      %v1098 = vld [vmem:[%s7 + $0x10] sm:$0xff]
      %v1099 = vld [vmem:[%s7 + $0x18] sm:$0xff]
      %v1100 = vld [vmem:[%s7 + $0x20] sm:$0xff]
      %v1101 = vld [vmem:[%s7 + $0x28] sm:$0xff]
      %v1102 = vld [vmem:[%s7 + $0x30] sm:$0xff]
      %v1103 = vld [vmem:[%s7 + $0x38] sm:$0xff]
      %v1104 = vld [vmem:[%s7 + $0x40] sm:$0xff]
      %v1105 = vld [vmem:[%s7 + $0x48] sm:$0xff]
      %v1106 = vld [vmem:[%s7 + $0x50] sm:$0xff]
      %v1107 = vld [vmem:[%s7 + $0x58] sm:$0xff]
      %v1108 = vld [vmem:[%s7 + $0x60] sm:$0xff]
      %v1109 = vld [vmem:[%s7 + $0x68] sm:$0xff]
      %v1110 = vld [vmem:[%s7 + $0x70] sm:$0xff]
      %v1111 = vld [vmem:[%s7 + $0x78] sm:$0xff]
      %1112 = vmatprep.subr.mxu0 0.0
      %1113 = vmatpush1.msra.mxu0 %v1096
      %1114 = vmatprep.subr.mxu0 0.0
      %1115 = vmatpush1.msra.mxu0 %v1097
      %1116 = vmatprep.subr.mxu0 0.0
      %1117 = vmatpush1.msra.mxu0 %v1098
      %1118 = vmatprep.subr.mxu0 0.0
      %1119 = vmatpush1.msra.mxu0 %v1099
      %1120 = vmatprep.subr.mxu0 0.0
      %1121 = vmatpush1.msra.mxu0 %v1100
      %1122 = vmatprep.subr.mxu0 0.0
      %1123 = vmatpush1.msra.mxu0 %v1101
      %1124 = vmatprep.subr.mxu0 0.0
      %1125 = vmatpush1.msra.mxu0 %v1102
      %1126 = vmatprep.subr.mxu0 0.0
      %1127 = vmatpush1.msra.mxu0 %v1103
      %1128 = vmatprep.subr.mxu0 0.0
      %1129 = vmatpush1.msra.mxu0 %v1104
      %1130 = vmatprep.subr.mxu0 0.0
      %1131 = vmatpush1.msra.mxu0 %v1105
      %1132 = vmatprep.subr.mxu0 0.0
      %1133 = vmatpush1.msra.mxu0 %v1106
      %1134 = vmatprep.subr.mxu0 0.0
      %1135 = vmatpush1.msra.mxu0 %v1107
      %1136 = vmatprep.subr.mxu0 0.0
      %1137 = vmatpush1.msra.mxu0 %v1108
      %1138 = vmatprep.subr.mxu0 0.0
      %1139 = vmatpush1.msra.mxu0 %v1109
      %1140 = vmatprep.subr.mxu0 0.0
      %1141 = vmatpush1.msra.mxu0 %v1110
      %1142 = vmatprep.subr.mxu0 0.0
      %1143 = vmatpush1.msra.mxu0 %v1111
      %1144 = vmatprep.subr.mxu0 0.0
      %1145 = vmatpush1.msra.mxu0 0.0
      %1146 = vmatprep.subr.mxu0 0.0
      %1147 = vmatpush1.msra.mxu0 0.0
      %1148 = vmatprep.subr.mxu0 0.0
      %1149 = vmatpush1.msra.mxu0 0.0
      %1150 = vmatprep.subr.mxu0 0.0
      %1151 = vmatpush1.msra.mxu0 0.0
      %1152 = vmatprep.subr.mxu0 0.0
      %1153 = vmatpush1.msra.mxu0 0.0
      %1154 = vmatprep.subr.mxu0 0.0
      %1155 = vmatpush1.msra.mxu0 0.0
      %1156 = vmatprep.subr.mxu0 0.0
      %1157 = vmatpush1.msra.mxu0 0.0
      %1158 = vmatprep.subr.mxu0 0.0
      %1159 = vmatpush1.msra.mxu0 0.0
      %1160 = vmatprep.subr.mxu0 0.0
      %1161 = vmatpush1.msra.mxu0 0.0
      %1162 = vmatprep.subr.mxu0 0.0
      %1163 = vmatpush1.msra.mxu0 0.0
      %1164 = vmatprep.subr.mxu0 0.0
      %1165 = vmatpush1.msra.mxu0 0.0
      %1166 = vmatprep.subr.mxu0 0.0
      %1167 = vmatpush1.msra.mxu0 0.0
      %1168 = vmatprep.subr.mxu0 0.0
      %1169 = vmatpush1.msra.mxu0 0.0
      %1170 = vmatprep.subr.mxu0 0.0
      %1171 = vmatpush1.msra.mxu0 0.0
      %1172 = vmatprep.subr.mxu0 0.0
      %1173 = vmatpush1.msra.mxu0 0.0
      %1174 = vmatprep.subr.mxu0 0.0
      %1175 = vmatpush1.msra.mxu0 0.0
      %1176 = vmatprep.mubr.f32.mxu0 0.0
      %1177 = vmatmul.mubr.f32.gmra.mrb[0].mxu0 %v1094
      %v1178 = vpop.f32.mrb[0].mxu0
      %v1179 = vadd.f32 %v592, %v1178
      %v1180 = vpop.f32.mrb[0].mxu0
      %1181 = vdwg.mxu0
      %s1182 = scalar_lea.vmem %s359, 8
      %1183 = vst [vmem:[%s1182] sm:$0xff] %v1179
      %v1184 = vld [vmem:[%s702] sm:$0xff]
      %s1185 = scalar_lea.vmem [#allocation3], 16
      %v1186 = vld [vmem:[%s1185] sm:$0xff]
      %v1187 = vld [vmem:[%s5] sm:$0xff]
      %v1188 = vld [vmem:[%s5 + $0x8] sm:$0xff]
      %v1189 = vld [vmem:[%s5 + $0x10] sm:$0xff]
      %v1190 = vld [vmem:[%s5 + $0x18] sm:$0xff]
      %v1191 = vld [vmem:[%s5 + $0x20] sm:$0xff]
      %v1192 = vld [vmem:[%s5 + $0x28] sm:$0xff]
      %v1193 = vld [vmem:[%s5 + $0x30] sm:$0xff]
      %v1194 = vld [vmem:[%s5 + $0x38] sm:$0xff]
      %v1195 = vld [vmem:[%s5 + $0x40] sm:$0xff]
      %v1196 = vld [vmem:[%s5 + $0x48] sm:$0xff]
      %v1197 = vld [vmem:[%s5 + $0x50] sm:$0xff]
      %v1198 = vld [vmem:[%s5 + $0x58] sm:$0xff]
      %v1199 = vld [vmem:[%s5 + $0x60] sm:$0xff]
      %v1200 = vld [vmem:[%s5 + $0x68] sm:$0xff]
      %v1201 = vld [vmem:[%s5 + $0x70] sm:$0xff]
      %v1202 = vld [vmem:[%s5 + $0x78] sm:$0xff]
      %1203 = vmatprep.subr.mxu0 0.0
      %1204 = vmatpush1.msra.mxu0 %v1187
      %1205 = vmatprep.subr.mxu0 0.0
      %1206 = vmatpush1.msra.mxu0 %v1188
      %1207 = vmatprep.subr.mxu0 0.0
      %1208 = vmatpush1.msra.mxu0 %v1189
      %1209 = vmatprep.subr.mxu0 0.0
      %1210 = vmatpush1.msra.mxu0 %v1190
      %1211 = vmatprep.subr.mxu0 0.0
      %1212 = vmatpush1.msra.mxu0 %v1191
      %1213 = vmatprep.subr.mxu0 0.0
      %1214 = vmatpush1.msra.mxu0 %v1192
      %1215 = vmatprep.subr.mxu0 0.0
      %1216 = vmatpush1.msra.mxu0 %v1193
      %1217 = vmatprep.subr.mxu0 0.0
      %1218 = vmatpush1.msra.mxu0 %v1194
      %1219 = vmatprep.subr.mxu0 0.0
      %1220 = vmatpush1.msra.mxu0 %v1195
      %1221 = vmatprep.subr.mxu0 0.0
      %1222 = vmatpush1.msra.mxu0 %v1196
      %1223 = vmatprep.subr.mxu0 0.0
      %1224 = vmatpush1.msra.mxu0 %v1197
      %1225 = vmatprep.subr.mxu0 0.0
      %1226 = vmatpush1.msra.mxu0 %v1198
      %1227 = vmatprep.subr.mxu0 0.0
      %1228 = vmatpush1.msra.mxu0 %v1199
      %1229 = vmatprep.subr.mxu0 0.0
      %1230 = vmatpush1.msra.mxu0 %v1200
      %1231 = vmatprep.subr.mxu0 0.0
      %1232 = vmatpush1.msra.mxu0 %v1201
      %1233 = vmatprep.subr.mxu0 0.0
      %1234 = vmatpush1.msra.mxu0 %v1202
      %1235 = vmatprep.subr.mxu0 0.0
      %1236 = vmatpush1.msra.mxu0 0.0
      %1237 = vmatprep.subr.mxu0 0.0
      %1238 = vmatpush1.msra.mxu0 0.0
      %1239 = vmatprep.subr.mxu0 0.0
      %1240 = vmatpush1.msra.mxu0 0.0
      %1241 = vmatprep.subr.mxu0 0.0
      %1242 = vmatpush1.msra.mxu0 0.0
      %1243 = vmatprep.subr.mxu0 0.0
      %1244 = vmatpush1.msra.mxu0 0.0
      %1245 = vmatprep.subr.mxu0 0.0
      %1246 = vmatpush1.msra.mxu0 0.0
      %1247 = vmatprep.subr.mxu0 0.0
      %1248 = vmatpush1.msra.mxu0 0.0
      %1249 = vmatprep.subr.mxu0 0.0
      %1250 = vmatpush1.msra.mxu0 0.0
      %1251 = vmatprep.subr.mxu0 0.0
      %1252 = vmatpush1.msra.mxu0 0.0
      %1253 = vmatprep.subr.mxu0 0.0
      %1254 = vmatpush1.msra.mxu0 0.0
      %1255 = vmatprep.subr.mxu0 0.0
      %1256 = vmatpush1.msra.mxu0 0.0
      %1257 = vmatprep.subr.mxu0 0.0
      %1258 = vmatpush1.msra.mxu0 0.0
      %1259 = vmatprep.subr.mxu0 0.0
      %1260 = vmatpush1.msra.mxu0 0.0
      %1261 = vmatprep.subr.mxu0 0.0
      %1262 = vmatpush1.msra.mxu0 0.0
      %1263 = vmatprep.subr.mxu0 0.0
      %1264 = vmatpush1.msra.mxu0 0.0
      %1265 = vmatprep.subr.mxu0 0.0
      %1266 = vmatpush1.msra.mxu0 0.0
      %1267 = vmatprep.mubr.f32.mxu0 0.0
      %1268 = vmatmul.mubr.f32.gmra.mrb[0].mxu0 %v1184
      %v1269 = vpop.f32.mrb[0].mxu0
      %v1270 = vadd.f32 0.0, %v1269
      %v1271 = vpop.f32.mrb[0].mxu0
      %1272 = vdwg.mxu0
      %v1273 = vadd.f32 %v1186, %v1270
      %v1274 = vxor.u32 %v1273, 2147483648
      %v1275 = vmul.f32 %v1274, 1.442695
      %v1276 = vpow.pop %v1275
      %v1277 = vadd.f32 %v1276, 1.0
      %v1278 = vrcp.pop %v1277
      %v1279 = vmul.f32 1.0, %v1278
      %v1280 = vmul.f32 %v1279, 0.5
      %v1281 = vmul.f32 %v1280, %v1184
      %v1282 = vsub.f32 1.0, %v1280
      %v1283 = vmul.f32 %v1280, %v1282
      %v1284 = vmul.f32 %v1283, 0.5
      %v1285 = vld [vmem:[#allocation2] sm:$0xff]
      %v1286 = vmul.f32 %v1284, %v1285
      %v1287 = vadd.f32 %v1281, %v1286
      %v1288 = vsub.f32 2.0, %v1280
      %v1289 = vmul.f32 %v1284, %v1288
      %v1290 = vmul.f32 %v1289, 0.33333334
      %v1291 = vld [vmem:[%s594] sm:$0xff]
      %v1292 = vmul.f32 %v1290, %v1291
      %v1293 = vadd.f32 %v1287, %v1292
      %v1294 = vsub.f32 3.0, %v1280
      %v1295 = vmul.f32 %v1290, %v1294
      %v1296 = vmul.f32 %v1295, 0.25
      %v1297 = vld [vmem:[%s695] sm:$0xff]
      %v1298 = vmul.f32 %v1296, %v1297
      %v1299 = vadd.f32 %v1293, %v1298
      %s1300 = scalar_lea.vmem [#allocation4], 16
      %v1301 = vld [vmem:[%s1300] sm:$0xff]
      %v1302 = vld [vmem:[%s6] sm:$0xff]
      %v1303 = vld [vmem:[%s6 + $0x8] sm:$0xff]
      %v1304 = vld [vmem:[%s6 + $0x10] sm:$0xff]
      %v1305 = vld [vmem:[%s6 + $0x18] sm:$0xff]
      %v1306 = vld [vmem:[%s6 + $0x20] sm:$0xff]
      %v1307 = vld [vmem:[%s6 + $0x28] sm:$0xff]
      %v1308 = vld [vmem:[%s6 + $0x30] sm:$0xff]
      %v1309 = vld [vmem:[%s6 + $0x38] sm:$0xff]
      %v1310 = vld [vmem:[%s6 + $0x40] sm:$0xff]
      %v1311 = vld [vmem:[%s6 + $0x48] sm:$0xff]
      %v1312 = vld [vmem:[%s6 + $0x50] sm:$0xff]
      %v1313 = vld [vmem:[%s6 + $0x58] sm:$0xff]
      %v1314 = vld [vmem:[%s6 + $0x60] sm:$0xff]
      %v1315 = vld [vmem:[%s6 + $0x68] sm:$0xff]
      %v1316 = vld [vmem:[%s6 + $0x70] sm:$0xff]
      %v1317 = vld [vmem:[%s6 + $0x78] sm:$0xff]
      %1318 = vmatprep.subr.mxu0 0.0
      %1319 = vmatpush1.msra.mxu0 %v1302
      %1320 = vmatprep.subr.mxu0 0.0
      %1321 = vmatpush1.msra.mxu0 %v1303
      %1322 = vmatprep.subr.mxu0 0.0
      %1323 = vmatpush1.msra.mxu0 %v1304
      %1324 = vmatprep.subr.mxu0 0.0
      %1325 = vmatpush1.msra.mxu0 %v1305
      %1326 = vmatprep.subr.mxu0 0.0
      %1327 = vmatpush1.msra.mxu0 %v1306
      %1328 = vmatprep.subr.mxu0 0.0
      %1329 = vmatpush1.msra.mxu0 %v1307
      %1330 = vmatprep.subr.mxu0 0.0
      %1331 = vmatpush1.msra.mxu0 %v1308
      %1332 = vmatprep.subr.mxu0 0.0
      %1333 = vmatpush1.msra.mxu0 %v1309
      %1334 = vmatprep.subr.mxu0 0.0
      %1335 = vmatpush1.msra.mxu0 %v1310
      %1336 = vmatprep.subr.mxu0 0.0
      %1337 = vmatpush1.msra.mxu0 %v1311
      %1338 = vmatprep.subr.mxu0 0.0
      %1339 = vmatpush1.msra.mxu0 %v1312
      %1340 = vmatprep.subr.mxu0 0.0
      %1341 = vmatpush1.msra.mxu0 %v1313
      %1342 = vmatprep.subr.mxu0 0.0
      %1343 = vmatpush1.msra.mxu0 %v1314
      %1344 = vmatprep.subr.mxu0 0.0
      %1345 = vmatpush1.msra.mxu0 %v1315
      %1346 = vmatprep.subr.mxu0 0.0
      %1347 = vmatpush1.msra.mxu0 %v1316
      %1348 = vmatprep.subr.mxu0 0.0
      %1349 = vmatpush1.msra.mxu0 %v1317
      %1350 = vmatprep.subr.mxu0 0.0
      %1351 = vmatpush1.msra.mxu0 0.0
      %1352 = vmatprep.subr.mxu0 0.0
      %1353 = vmatpush1.msra.mxu0 0.0
      %1354 = vmatprep.subr.mxu0 0.0
      %1355 = vmatpush1.msra.mxu0 0.0
      %1356 = vmatprep.subr.mxu0 0.0
      %1357 = vmatpush1.msra.mxu0 0.0
      %1358 = vmatprep.subr.mxu0 0.0
      %1359 = vmatpush1.msra.mxu0 0.0
      %1360 = vmatprep.subr.mxu0 0.0
      %1361 = vmatpush1.msra.mxu0 0.0
      %1362 = vmatprep.subr.mxu0 0.0
      %1363 = vmatpush1.msra.mxu0 0.0
      %1364 = vmatprep.subr.mxu0 0.0
      %1365 = vmatpush1.msra.mxu0 0.0
      %1366 = vmatprep.subr.mxu0 0.0
      %1367 = vmatpush1.msra.mxu0 0.0
      %1368 = vmatprep.subr.mxu0 0.0
      %1369 = vmatpush1.msra.mxu0 0.0
      %1370 = vmatprep.subr.mxu0 0.0
      %1371 = vmatpush1.msra.mxu0 0.0
      %1372 = vmatprep.subr.mxu0 0.0
      %1373 = vmatpush1.msra.mxu0 0.0
      %1374 = vmatprep.subr.mxu0 0.0
      %1375 = vmatpush1.msra.mxu0 0.0
      %1376 = vmatprep.subr.mxu0 0.0
      %1377 = vmatpush1.msra.mxu0 0.0
      %1378 = vmatprep.subr.mxu0 0.0
      %1379 = vmatpush1.msra.mxu0 0.0
      %1380 = vmatprep.subr.mxu0 0.0
      %1381 = vmatpush1.msra.mxu0 0.0
      %1382 = vmatprep.mubr.f32.mxu0 0.0
      %1383 = vmatmul.mubr.f32.gmra.mrb[0].mxu0 %v1299
      %v1384 = vpop.f32.mrb[0].mxu0
      %v1385 = vadd.f32 0.0, %v1384
      %v1386 = vpop.f32.mrb[0].mxu0
      %1387 = vdwg.mxu0
      %v1388 = vadd.f32 %v1301, %v1385
      %v1389 = vtanh.pop %v1388
      %1390 = vst [vmem:[%s695] sm:$0xff] %v1389
      %v1391 = vld [vmem:[%s7] sm:$0xff]
      %v1392 = vld [vmem:[%s7 + $0x8] sm:$0xff]
      %v1393 = vld [vmem:[%s7 + $0x10] sm:$0xff]
      %v1394 = vld [vmem:[%s7 + $0x18] sm:$0xff]
      %v1395 = vld [vmem:[%s7 + $0x20] sm:$0xff]
      %v1396 = vld [vmem:[%s7 + $0x28] sm:$0xff]
      %v1397 = vld [vmem:[%s7 + $0x30] sm:$0xff]
      %v1398 = vld [vmem:[%s7 + $0x38] sm:$0xff]
      %v1399 = vld [vmem:[%s7 + $0x40] sm:$0xff]
      %v1400 = vld [vmem:[%s7 + $0x48] sm:$0xff]
      %v1401 = vld [vmem:[%s7 + $0x50] sm:$0xff]
      %v1402 = vld [vmem:[%s7 + $0x58] sm:$0xff]
      %v1403 = vld [vmem:[%s7 + $0x60] sm:$0xff]
      %v1404 = vld [vmem:[%s7 + $0x68] sm:$0xff]
      %v1405 = vld [vmem:[%s7 + $0x70] sm:$0xff]
      %v1406 = vld [vmem:[%s7 + $0x78] sm:$0xff]
      %1407 = vmatprep.subr.mxu0 0.0
      %1408 = vmatpush1.msra.mxu0 %v1391
      %1409 = vmatprep.subr.mxu0 0.0
      %1410 = vmatpush1.msra.mxu0 %v1392
      %1411 = vmatprep.subr.mxu0 0.0
      %1412 = vmatpush1.msra.mxu0 %v1393
      %1413 = vmatprep.subr.mxu0 0.0
      %1414 = vmatpush1.msra.mxu0 %v1394
      %1415 = vmatprep.subr.mxu0 0.0
      %1416 = vmatpush1.msra.mxu0 %v1395
      %1417 = vmatprep.subr.mxu0 0.0
      %1418 = vmatpush1.msra.mxu0 %v1396
      %1419 = vmatprep.subr.mxu0 0.0
      %1420 = vmatpush1.msra.mxu0 %v1397
      %1421 = vmatprep.subr.mxu0 0.0
      %1422 = vmatpush1.msra.mxu0 %v1398
      %1423 = vmatprep.subr.mxu0 0.0
      %1424 = vmatpush1.msra.mxu0 %v1399
      %1425 = vmatprep.subr.mxu0 0.0
      %1426 = vmatpush1.msra.mxu0 %v1400
      %1427 = vmatprep.subr.mxu0 0.0
      %1428 = vmatpush1.msra.mxu0 %v1401
      %1429 = vmatprep.subr.mxu0 0.0
      %1430 = vmatpush1.msra.mxu0 %v1402
      %1431 = vmatprep.subr.mxu0 0.0
      %1432 = vmatpush1.msra.mxu0 %v1403
      %1433 = vmatprep.subr.mxu0 0.0
      %1434 = vmatpush1.msra.mxu0 %v1404
      %1435 = vmatprep.subr.mxu0 0.0
      %1436 = vmatpush1.msra.mxu0 %v1405
      %1437 = vmatprep.subr.mxu0 0.0
      %1438 = vmatpush1.msra.mxu0 %v1406
      %1439 = vmatprep.subr.mxu0 0.0
      %1440 = vmatpush1.msra.mxu0 0.0
      %1441 = vmatprep.subr.mxu0 0.0
      %1442 = vmatpush1.msra.mxu0 0.0
      %1443 = vmatprep.subr.mxu0 0.0
      %1444 = vmatpush1.msra.mxu0 0.0
      %1445 = vmatprep.subr.mxu0 0.0
      %1446 = vmatpush1.msra.mxu0 0.0
      %1447 = vmatprep.subr.mxu0 0.0
      %1448 = vmatpush1.msra.mxu0 0.0
      %1449 = vmatprep.subr.mxu0 0.0
      %1450 = vmatpush1.msra.mxu0 0.0
      %1451 = vmatprep.subr.mxu0 0.0
      %1452 = vmatpush1.msra.mxu0 0.0
      %1453 = vmatprep.subr.mxu0 0.0
      %1454 = vmatpush1.msra.mxu0 0.0
      %1455 = vmatprep.subr.mxu0 0.0
      %1456 = vmatpush1.msra.mxu0 0.0
      %1457 = vmatprep.subr.mxu0 0.0
      %1458 = vmatpush1.msra.mxu0 0.0
      %1459 = vmatprep.subr.mxu0 0.0
      %1460 = vmatpush1.msra.mxu0 0.0
      %1461 = vmatprep.subr.mxu0 0.0
      %1462 = vmatpush1.msra.mxu0 0.0
      %1463 = vmatprep.subr.mxu0 0.0
      %1464 = vmatpush1.msra.mxu0 0.0
      %1465 = vmatprep.subr.mxu0 0.0
      %1466 = vmatpush1.msra.mxu0 0.0
      %1467 = vmatprep.subr.mxu0 0.0
      %1468 = vmatpush1.msra.mxu0 0.0
      %1469 = vmatprep.subr.mxu0 0.0
      %1470 = vmatpush1.msra.mxu0 0.0
      %1471 = vmatprep.mubr.f32.mxu0 0.0
      %1472 = vmatmul.mubr.f32.gmra.mrb[0].mxu0 %v1389
      %v1473 = vpop.f32.mrb[0].mxu0
      %v1474 = vadd.f32 %v592, %v1473
      %v1475 = vpop.f32.mrb[0].mxu0
      %1476 = vdwg.mxu0
      %s1477 = scalar_lea.vmem %s359, 16
      %1478 = vst [vmem:[%s1477] sm:$0xff] %v1474
      %v1479 = vld [vmem:[%s695] sm:$0xff]
      %s1480 = scalar_lea.vmem [#allocation3], 24
      %v1481 = vld [vmem:[%s1480] sm:$0xff]
      %v1482 = vld [vmem:[%s5] sm:$0xff]
      %v1483 = vld [vmem:[%s5 + $0x8] sm:$0xff]
      %v1484 = vld [vmem:[%s5 + $0x10] sm:$0xff]
      %v1485 = vld [vmem:[%s5 + $0x18] sm:$0xff]
      %v1486 = vld [vmem:[%s5 + $0x20] sm:$0xff]
      %v1487 = vld [vmem:[%s5 + $0x28] sm:$0xff]
      %v1488 = vld [vmem:[%s5 + $0x30] sm:$0xff]
      %v1489 = vld [vmem:[%s5 + $0x38] sm:$0xff]
      %v1490 = vld [vmem:[%s5 + $0x40] sm:$0xff]
      %v1491 = vld [vmem:[%s5 + $0x48] sm:$0xff]
      %v1492 = vld [vmem:[%s5 + $0x50] sm:$0xff]
      %v1493 = vld [vmem:[%s5 + $0x58] sm:$0xff]
      %v1494 = vld [vmem:[%s5 + $0x60] sm:$0xff]
      %v1495 = vld [vmem:[%s5 + $0x68] sm:$0xff]
      %v1496 = vld [vmem:[%s5 + $0x70] sm:$0xff]
      %v1497 = vld [vmem:[%s5 + $0x78] sm:$0xff]
      %1498 = vmatprep.subr.mxu0 0.0
      %1499 = vmatpush1.msra.mxu0 %v1482
      %1500 = vmatprep.subr.mxu0 0.0
      %1501 = vmatpush1.msra.mxu0 %v1483
      %1502 = vmatprep.subr.mxu0 0.0
      %1503 = vmatpush1.msra.mxu0 %v1484
      %1504 = vmatprep.subr.mxu0 0.0
      %1505 = vmatpush1.msra.mxu0 %v1485
      %1506 = vmatprep.subr.mxu0 0.0
      %1507 = vmatpush1.msra.mxu0 %v1486
      %1508 = vmatprep.subr.mxu0 0.0
      %1509 = vmatpush1.msra.mxu0 %v1487
      %1510 = vmatprep.subr.mxu0 0.0
      %1511 = vmatpush1.msra.mxu0 %v1488
      %1512 = vmatprep.subr.mxu0 0.0
      %1513 = vmatpush1.msra.mxu0 %v1489
      %1514 = vmatprep.subr.mxu0 0.0
      %1515 = vmatpush1.msra.mxu0 %v1490
      %1516 = vmatprep.subr.mxu0 0.0
      %1517 = vmatpush1.msra.mxu0 %v1491
      %1518 = vmatprep.subr.mxu0 0.0
      %1519 = vmatpush1.msra.mxu0 %v1492
      %1520 = vmatprep.subr.mxu0 0.0
      %1521 = vmatpush1.msra.mxu0 %v1493
      %1522 = vmatprep.subr.mxu0 0.0
      %1523 = vmatpush1.msra.mxu0 %v1494
      %1524 = vmatprep.subr.mxu0 0.0
      %1525 = vmatpush1.msra.mxu0 %v1495
      %1526 = vmatprep.subr.mxu0 0.0
      %1527 = vmatpush1.msra.mxu0 %v1496
      %1528 = vmatprep.subr.mxu0 0.0
      %1529 = vmatpush1.msra.mxu0 %v1497
      %1530 = vmatprep.subr.mxu0 0.0
      %1531 = vmatpush1.msra.mxu0 0.0
      %1532 = vmatprep.subr.mxu0 0.0
      %1533 = vmatpush1.msra.mxu0 0.0
      %1534 = vmatprep.subr.mxu0 0.0
      %1535 = vmatpush1.msra.mxu0 0.0
      %1536 = vmatprep.subr.mxu0 0.0
      %1537 = vmatpush1.msra.mxu0 0.0
      %1538 = vmatprep.subr.mxu0 0.0
      %1539 = vmatpush1.msra.mxu0 0.0
      %1540 = vmatprep.subr.mxu0 0.0
      %1541 = vmatpush1.msra.mxu0 0.0
      %1542 = vmatprep.subr.mxu0 0.0
      %1543 = vmatpush1.msra.mxu0 0.0
      %1544 = vmatprep.subr.mxu0 0.0
      %1545 = vmatpush1.msra.mxu0 0.0
      %1546 = vmatprep.subr.mxu0 0.0
      %1547 = vmatpush1.msra.mxu0 0.0
      %1548 = vmatprep.subr.mxu0 0.0
      %1549 = vmatpush1.msra.mxu0 0.0
      %1550 = vmatprep.subr.mxu0 0.0
      %1551 = vmatpush1.msra.mxu0 0.0
      %1552 = vmatprep.subr.mxu0 0.0
      %1553 = vmatpush1.msra.mxu0 0.0
      %1554 = vmatprep.subr.mxu0 0.0
      %1555 = vmatpush1.msra.mxu0 0.0
      %1556 = vmatprep.subr.mxu0 0.0
      %1557 = vmatpush1.msra.mxu0 0.0
      %1558 = vmatprep.subr.mxu0 0.0
      %1559 = vmatpush1.msra.mxu0 0.0
      %1560 = vmatprep.subr.mxu0 0.0
      %1561 = vmatpush1.msra.mxu0 0.0
      %1562 = vmatprep.mubr.f32.mxu0 0.0
      %1563 = vmatmul.mubr.f32.gmra.mrb[0].mxu0 %v1479
      %v1564 = vpop.f32.mrb[0].mxu0
      %v1565 = vadd.f32 0.0, %v1564
      %v1566 = vpop.f32.mrb[0].mxu0
      %1567 = vdwg.mxu0
      %v1568 = vadd.f32 %v1481, %v1565
      %v1569 = vxor.u32 %v1568, 2147483648
      %v1570 = vmul.f32 %v1569, 1.442695
      %v1571 = vpow.pop %v1570
      %v1572 = vadd.f32 %v1571, 1.0
      %v1573 = vrcp.pop %v1572
      %v1574 = vmul.f32 1.0, %v1573
      %v1575 = vmul.f32 %v1574, 0.5
      %v1576 = vmul.f32 %v1575, %v1479
      %v1577 = vsub.f32 1.0, %v1575
      %v1578 = vmul.f32 %v1575, %v1577
      %v1579 = vmul.f32 %v1578, 0.5
      %v1580 = vld [vmem:[%s702] sm:$0xff]
      %v1581 = vmul.f32 %v1579, %v1580
      %v1582 = vadd.f32 %v1576, %v1581
      %v1583 = vsub.f32 2.0, %v1575
      %v1584 = vmul.f32 %v1579, %v1583
      %v1585 = vmul.f32 %v1584, 0.33333334
      %v1586 = vld [vmem:[#allocation2] sm:$0xff]
      %v1587 = vmul.f32 %v1585, %v1586
      %v1588 = vadd.f32 %v1582, %v1587
      %v1589 = vsub.f32 3.0, %v1575
      %v1590 = vmul.f32 %v1585, %v1589
      %v1591 = vmul.f32 %v1590, 0.25
      %v1592 = vld [vmem:[%s594] sm:$0xff]
      %v1593 = vmul.f32 %v1591, %v1592
      %v1594 = vadd.f32 %v1588, %v1593
      %s1595 = scalar_lea.vmem [#allocation4], 24
      %v1596 = vld [vmem:[%s1595] sm:$0xff]
      %v1597 = vld [vmem:[%s6] sm:$0xff]
      %v1598 = vld [vmem:[%s6 + $0x8] sm:$0xff]
      %v1599 = vld [vmem:[%s6 + $0x10] sm:$0xff]
      %v1600 = vld [vmem:[%s6 + $0x18] sm:$0xff]
      %v1601 = vld [vmem:[%s6 + $0x20] sm:$0xff]
      %v1602 = vld [vmem:[%s6 + $0x28] sm:$0xff]
      %v1603 = vld [vmem:[%s6 + $0x30] sm:$0xff]
      %v1604 = vld [vmem:[%s6 + $0x38] sm:$0xff]
      %v1605 = vld [vmem:[%s6 + $0x40] sm:$0xff]
      %v1606 = vld [vmem:[%s6 + $0x48] sm:$0xff]
      %v1607 = vld [vmem:[%s6 + $0x50] sm:$0xff]
      %v1608 = vld [vmem:[%s6 + $0x58] sm:$0xff]
      %v1609 = vld [vmem:[%s6 + $0x60] sm:$0xff]
      %v1610 = vld [vmem:[%s6 + $0x68] sm:$0xff]
      %v1611 = vld [vmem:[%s6 + $0x70] sm:$0xff]
      %v1612 = vld [vmem:[%s6 + $0x78] sm:$0xff]
      %1613 = vmatprep.subr.mxu0 0.0
      %1614 = vmatpush1.msra.mxu0 %v1597
      %1615 = vmatprep.subr.mxu0 0.0
      %1616 = vmatpush1.msra.mxu0 %v1598
      %1617 = vmatprep.subr.mxu0 0.0
      %1618 = vmatpush1.msra.mxu0 %v1599
      %1619 = vmatprep.subr.mxu0 0.0
      %1620 = vmatpush1.msra.mxu0 %v1600
      %1621 = vmatprep.subr.mxu0 0.0
      %1622 = vmatpush1.msra.mxu0 %v1601
      %1623 = vmatprep.subr.mxu0 0.0
      %1624 = vmatpush1.msra.mxu0 %v1602
      %1625 = vmatprep.subr.mxu0 0.0
      %1626 = vmatpush1.msra.mxu0 %v1603
      %1627 = vmatprep.subr.mxu0 0.0
      %1628 = vmatpush1.msra.mxu0 %v1604
      %1629 = vmatprep.subr.mxu0 0.0
      %1630 = vmatpush1.msra.mxu0 %v1605
      %1631 = vmatprep.subr.mxu0 0.0
      %1632 = vmatpush1.msra.mxu0 %v1606
      %1633 = vmatprep.subr.mxu0 0.0
      %1634 = vmatpush1.msra.mxu0 %v1607
      %1635 = vmatprep.subr.mxu0 0.0
      %1636 = vmatpush1.msra.mxu0 %v1608
      %1637 = vmatprep.subr.mxu0 0.0
      %1638 = vmatpush1.msra.mxu0 %v1609
      %1639 = vmatprep.subr.mxu0 0.0
      %1640 = vmatpush1.msra.mxu0 %v1610
      %1641 = vmatprep.subr.mxu0 0.0
      %1642 = vmatpush1.msra.mxu0 %v1611
      %1643 = vmatprep.subr.mxu0 0.0
      %1644 = vmatpush1.msra.mxu0 %v1612
      %1645 = vmatprep.subr.mxu0 0.0
      %1646 = vmatpush1.msra.mxu0 0.0
      %1647 = vmatprep.subr.mxu0 0.0
      %1648 = vmatpush1.msra.mxu0 0.0
      %1649 = vmatprep.subr.mxu0 0.0
      %1650 = vmatpush1.msra.mxu0 0.0
      %1651 = vmatprep.subr.mxu0 0.0
      %1652 = vmatpush1.msra.mxu0 0.0
      %1653 = vmatprep.subr.mxu0 0.0
      %1654 = vmatpush1.msra.mxu0 0.0
      %1655 = vmatprep.subr.mxu0 0.0
      %1656 = vmatpush1.msra.mxu0 0.0
      %1657 = vmatprep.subr.mxu0 0.0
      %1658 = vmatpush1.msra.mxu0 0.0
      %1659 = vmatprep.subr.mxu0 0.0
      %1660 = vmatpush1.msra.mxu0 0.0
      %1661 = vmatprep.subr.mxu0 0.0
      %1662 = vmatpush1.msra.mxu0 0.0
      %1663 = vmatprep.subr.mxu0 0.0
      %1664 = vmatpush1.msra.mxu0 0.0
      %1665 = vmatprep.subr.mxu0 0.0
      %1666 = vmatpush1.msra.mxu0 0.0
      %1667 = vmatprep.subr.mxu0 0.0
      %1668 = vmatpush1.msra.mxu0 0.0
      %1669 = vmatprep.subr.mxu0 0.0
      %1670 = vmatpush1.msra.mxu0 0.0
      %1671 = vmatprep.subr.mxu0 0.0
      %1672 = vmatpush1.msra.mxu0 0.0
      %1673 = vmatprep.subr.mxu0 0.0
      %1674 = vmatpush1.msra.mxu0 0.0
      %1675 = vmatprep.subr.mxu0 0.0
      %1676 = vmatpush1.msra.mxu0 0.0
      %1677 = vmatprep.mubr.f32.mxu0 0.0
      %1678 = vmatmul.mubr.f32.gmra.mrb[0].mxu0 %v1594
      %v1679 = vpop.f32.mrb[0].mxu0
      %v1680 = vadd.f32 0.0, %v1679
      %v1681 = vpop.f32.mrb[0].mxu0
      %1682 = vdwg.mxu0
      %v1683 = vadd.f32 %v1596, %v1680
      %v1684 = vtanh.pop %v1683
      %1685 = vst [vmem:[%s594] sm:$0xff] %v1684
      %v1686 = vld [vmem:[%s7] sm:$0xff]
      %v1687 = vld [vmem:[%s7 + $0x8] sm:$0xff]
      %v1688 = vld [vmem:[%s7 + $0x10] sm:$0xff]
      %v1689 = vld [vmem:[%s7 + $0x18] sm:$0xff]
      %v1690 = vld [vmem:[%s7 + $0x20] sm:$0xff]
      %v1691 = vld [vmem:[%s7 + $0x28] sm:$0xff]
      %v1692 = vld [vmem:[%s7 + $0x30] sm:$0xff]
      %v1693 = vld [vmem:[%s7 + $0x38] sm:$0xff]
      %v1694 = vld [vmem:[%s7 + $0x40] sm:$0xff]
      %v1695 = vld [vmem:[%s7 + $0x48] sm:$0xff]
      %v1696 = vld [vmem:[%s7 + $0x50] sm:$0xff]
      %v1697 = vld [vmem:[%s7 + $0x58] sm:$0xff]
      %v1698 = vld [vmem:[%s7 + $0x60] sm:$0xff]
      %v1699 = vld [vmem:[%s7 + $0x68] sm:$0xff]
      %v1700 = vld [vmem:[%s7 + $0x70] sm:$0xff]
      %v1701 = vld [vmem:[%s7 + $0x78] sm:$0xff]
      %1702 = vmatprep.subr.mxu0 0.0
      %1703 = vmatpush1.msra.mxu0 %v1686
      %1704 = vmatprep.subr.mxu0 0.0
      %1705 = vmatpush1.msra.mxu0 %v1687
      %1706 = vmatprep.subr.mxu0 0.0
      %1707 = vmatpush1.msra.mxu0 %v1688
      %1708 = vmatprep.subr.mxu0 0.0
      %1709 = vmatpush1.msra.mxu0 %v1689
      %1710 = vmatprep.subr.mxu0 0.0
      %1711 = vmatpush1.msra.mxu0 %v1690
      %1712 = vmatprep.subr.mxu0 0.0
      %1713 = vmatpush1.msra.mxu0 %v1691
      %1714 = vmatprep.subr.mxu0 0.0
      %1715 = vmatpush1.msra.mxu0 %v1692
      %1716 = vmatprep.subr.mxu0 0.0
      %1717 = vmatpush1.msra.mxu0 %v1693
      %1718 = vmatprep.subr.mxu0 0.0
      %1719 = vmatpush1.msra.mxu0 %v1694
      %1720 = vmatprep.subr.mxu0 0.0
      %1721 = vmatpush1.msra.mxu0 %v1695
      %1722 = vmatprep.subr.mxu0 0.0
      %1723 = vmatpush1.msra.mxu0 %v1696
      %1724 = vmatprep.subr.mxu0 0.0
      %1725 = vmatpush1.msra.mxu0 %v1697
      %1726 = vmatprep.subr.mxu0 0.0
      %1727 = vmatpush1.msra.mxu0 %v1698
      %1728 = vmatprep.subr.mxu0 0.0
      %1729 = vmatpush1.msra.mxu0 %v1699
      %1730 = vmatprep.subr.mxu0 0.0
      %1731 = vmatpush1.msra.mxu0 %v1700
      %1732 = vmatprep.subr.mxu0 0.0
      %1733 = vmatpush1.msra.mxu0 %v1701
      %1734 = vmatprep.subr.mxu0 0.0
      %1735 = vmatpush1.msra.mxu0 0.0
      %1736 = vmatprep.subr.mxu0 0.0
      %1737 = vmatpush1.msra.mxu0 0.0
      %1738 = vmatprep.subr.mxu0 0.0
      %1739 = vmatpush1.msra.mxu0 0.0
      %1740 = vmatprep.subr.mxu0 0.0
      %1741 = vmatpush1.msra.mxu0 0.0
      %1742 = vmatprep.subr.mxu0 0.0
      %1743 = vmatpush1.msra.mxu0 0.0
      %1744 = vmatprep.subr.mxu0 0.0
      %1745 = vmatpush1.msra.mxu0 0.0
      %1746 = vmatprep.subr.mxu0 0.0
      %1747 = vmatpush1.msra.mxu0 0.0
      %1748 = vmatprep.subr.mxu0 0.0
      %1749 = vmatpush1.msra.mxu0 0.0
      %1750 = vmatprep.subr.mxu0 0.0
      %1751 = vmatpush1.msra.mxu0 0.0
      %1752 = vmatprep.subr.mxu0 0.0
      %1753 = vmatpush1.msra.mxu0 0.0
      %1754 = vmatprep.subr.mxu0 0.0
      %1755 = vmatpush1.msra.mxu0 0.0
      %1756 = vmatprep.subr.mxu0 0.0
      %1757 = vmatpush1.msra.mxu0 0.0
      %1758 = vmatprep.subr.mxu0 0.0
      %1759 = vmatpush1.msra.mxu0 0.0
      %1760 = vmatprep.subr.mxu0 0.0
      %1761 = vmatpush1.msra.mxu0 0.0
      %1762 = vmatprep.subr.mxu0 0.0
      %1763 = vmatpush1.msra.mxu0 0.0
      %1764 = vmatprep.subr.mxu0 0.0
      %1765 = vmatpush1.msra.mxu0 0.0
      %1766 = vmatprep.mubr.f32.mxu0 0.0
      %1767 = vmatmul.mubr.f32.gmra.mrb[0].mxu0 %v1684
      %v1768 = vpop.f32.mrb[0].mxu0
      %v1769 = vadd.f32 %v592, %v1768
      %v1770 = vpop.f32.mrb[0].mxu0
      %1771 = vdwg.mxu0
      %s1772 = scalar_lea.vmem %s359, 24
      %1773 = vst [vmem:[%s1772] sm:$0xff] %v1769
      %p1774 = scmp.eq.s32.totalorder %s22, 1
      // Predicated region
      $region61: #{mrnn_forward.1} parent=55 // pred_check
        %p1775 = pneg %p1774
      $region62: #{mrnn_forward.1} parent=55 // pred_check_branch
        %1777 = sbr.rel (%p1775) target = $region64
      $region63: #{mrnn_forward.1} parent=55 // pred_region
        %v1778 = vld [vmem:[%s594] sm:$0xff]
        %1779 = vst [vmem:[%s10] sm:$0xff] %v1778
        %v1780 = vld [vmem:[%s695] sm:$0xff]
        %s1781 = scalar_lea.vmem %s10, 8
        %1782 = vst [vmem:[%s1781] sm:$0xff] %v1780
        %v1783 = vld [vmem:[%s702] sm:$0xff]
        %s1784 = scalar_lea.vmem %s10, 16
        %1785 = vst [vmem:[%s1784] sm:$0xff] %v1783
        %v1786 = vld [vmem:[#allocation2] sm:$0xff]
        %s1787 = scalar_lea.vmem %s10, 24
        %1788 = vst [vmem:[%s1787] sm:$0xff] %v1786
      $region64: #{mrnn_forward.1} parent=55 // pred_fallthru
        _
      %s1789 = smul.u32 4, %s22
      %p1790 = scmp.lt.s32.totalorder %s1789, 7
      %s1791 = scalar_select %p1790, %s1789, 7
      %s1792 = smul.addr %s1791, 8
      %s1793 = scalar_lea.vmem %s9, %s1792
      // Predicated region
      $region65: #{mrnn_forward.1} parent=55 // pred_check
        %p1794 = pneg %p234
      $region66: #{mrnn_forward.1} parent=55 // pred_check_branch
        %1796 = sbr.rel (%p1794) target = $region68
      $region67: #{mrnn_forward.1} parent=55 // pred_region
        %s1797 = smul.u32 4, %s22
      $region68: #{mrnn_forward.1} parent=55 // pred_fallthru
        _
      // Predicated region
      $region69: #{mrnn_forward.1} parent=55 // pred_check
        %p1798 = pneg %p255
      $region70: #{mrnn_forward.1} parent=55 // pred_check_branch
        %1800 = sbr.rel (%p1798) target = $region72
      $region71: #{mrnn_forward.1} parent=55 // pred_region
        _
      $region72: #{mrnn_forward.1} parent=55 // pred_fallthru
        _
      // Predicated region
      $region73: #{mrnn_forward.1} parent=55 // pred_check
        %p1801 = pneg %p255
      $region74: #{mrnn_forward.1} parent=55 // pred_check_branch
        %1803 = sbr.rel (%p1801) target = $region76
      $region75: #{mrnn_forward.1} parent=55 // pred_region
        _
      $region76: #{mrnn_forward.1} parent=55 // pred_fallthru
        _
    $region56: #{mrnn_forward.1} parent=5 // pred_fallthru
      _
    %p1804 = scmp.le.s32.totalorder 2, %s17
    // Predicated region
    $region77: #{mrnn_forward.1} parent=5 // pred_check
      %p1805 = pneg %p1804
    $region78: #{mrnn_forward.1} parent=5 // pred_check_branch
      %1807 = sbr.rel (%p1805) target = $region80
    $region79: #{mrnn_forward.1} parent=5 // pred_region
      %s1808 = ssub.s32 %s17, 2
      // Predicated region
      $region81: #{mrnn_forward.1} parent=79 // pred_check
        %p1809 = pneg %p240
      $region82: #{mrnn_forward.1} parent=79 // pred_check_branch
        %1811 = sbr.rel (%p1809) target = $region84
      $region83: #{mrnn_forward.1} parent=79 // pred_region
        %s1812 = smul.u32 4, %s23
        %p1813 = scmp.lt.s32.totalorder %s1812, 7
        %s1814 = scalar_select %p1813, %s1812, 7
        %s1815 = smul.addr %s1814, 8
        %s1816 = scalar_lea.vmem %s9, %s1815
      $region84: #{mrnn_forward.1} parent=79 // pred_fallthru
        _
    $region80: #{mrnn_forward.1} parent=5 // pred_fallthru
      _
  $region6: #{mrnn_forward.1} parent=0 // loop_footer
    %s21 = sadd.s32 1, %s17
  $region7: #{mrnn_forward.1} parent=0 // loop_footer_branch
    %16 = sbr.rel target = $region3
  $region8: #{mrnn_forward.1} parent=0 // loop_exit
    _

</llo_original>
